<compile_context>
chip_gen: v6e
topology: v6e:2x2x1
jax: 0.10.0
libtpu: 0.0.40
codegen_flags: <defaults>
</compile_context>

<pallas_src>
import jax
import jax.numpy as jnp
from jax.experimental import pallas as pl
from jax.experimental.pallas import tpu as pltpu

jax.config.update("jax_default_matmul_precision", "highest")

NUM_INDIVIDUALS = 16
EMBEDDING_DIM = 32     # D
ENCODER_DIM = 32
HIDDEN = 64            # projector hidden width
MAX_TILE_B = 4096      # largest batch tile (lanes) per grid step


# ---------------------------------------------------------------------------
# Pallas kernel: projector MLP + fused (pre-normalized) embedding scores.
# Compute is feature-major ([feature, batch_tile]); batch sits on lanes.
# ---------------------------------------------------------------------------
def agree_disagree_kernel(ids_ref, x_ref, w1t_ref, b1_ref, w2t_ref, b2_ref,
                          sw_ref, sb_ref, out_ref):
    tb = x_ref.shape[0]             # batch tile (lane width)
    n_ind = sw_ref.shape[0] // 2    # number of individuals

    # --- projector layer 1: h = relu(W1^T @ x^T + b1) -> (H, TB) ------------
    # rhs contracts on its LAST dim, so the batch-major e_q tile needs no
    # wrapper transpose; any layout shuffle lands on the idle XLU.
    h = jax.lax.dot_general(
        w1t_ref[...], x_ref[...],
        dimension_numbers=(((1,), (1,)), ((), ())),
        precision=jax.lax.Precision.HIGHEST,
        preferred_element_type=jnp.float32) + b1_ref[...]
    h = jnp.maximum(h, 0.0)

    # --- projector layer 2 (only needed for ||eq||): eq = W2^T @ h + b2 -----
    eq = jnp.dot(w2t_ref[...], h,
                 precision=jax.lax.Precision.HIGHEST,
                 preferred_element_type=jnp.float32) + b2_ref[...]       # (D, TB)

    # --- fused, pre-normalized embedding scores -----------------------------
    # sw = [A_hat; D_hat] @ W2^T, sb = [A_hat; D_hat] @ b2  =>
    # scores[n, :]       = <eq, agree_hat[n]>
    # scores[N + n, :]   = <eq, disagree_hat[n]>
    scores = jnp.dot(sw_ref[...], h,
                     precision=jax.lax.Precision.HIGHEST,
                     preferred_element_type=jnp.float32) + sb_ref[...]   # (2N, TB)

    # --- select row i via one-hot masked sublane sums -----------------------
    ids = ids_ref[...]                                                   # (1, TB)
    rows = jax.lax.broadcasted_iota(jnp.int32, (n_ind, tb), 0)
    sel = (rows == ids).astype(jnp.float32)                              # (N, TB)
    a_num = jnp.sum(scores[:n_ind, :] * sel, axis=0, keepdims=True)      # (1, TB)
    d_num = jnp.sum(scores[n_ind:, :] * sel, axis=0, keepdims=True)      # (1, TB)

    # --- cosine denominator: only ||eq|| remains (tables are pre-normalized)
    # clamp on the squared norm with eps^2 == clamping the norm at eps=1e-8.
    eps2 = jnp.float32(1e-16)
    inv_eq = jax.lax.rsqrt(jnp.maximum(jnp.sum(eq * eq, axis=0, keepdims=True), eps2))

    # torch.stack([d, a], dim=-1): lane-dense rows here, transposed in wrapper.
    out_ref[0:1, :] = d_num * inv_eq
    out_ref[1:2, :] = a_num * inv_eq


# ---------------------------------------------------------------------------
# Host-side parameter repack (one-off): feature-major weights + algebraic
# fusion of the row-normalized embedding tables into the projector's last layer.
# ---------------------------------------------------------------------------
def prepare_kernel_params(params):
    eps = 1e-8
    a = params["agree_weight"]                                  # (N, D)
    d = params["disagree_weight"]                               # (N, D)
    a_hat = a / jnp.maximum(jnp.linalg.norm(a, axis=-1, keepdims=True), eps)
    d_hat = d / jnp.maximum(jnp.linalg.norm(d, axis=-1, keepdims=True), eps)
    ad = jnp.concatenate([a_hat, d_hat], axis=0)                # (2N, D) agree rows first
    w2t = params["w2"].T                                        # (D, H)
    b2c = params["b2"].reshape(-1, 1)                           # (D, 1)
    return {
        "w1t": params["w1"].T,                                  # (H, enc)
        "b1c": params["b1"].reshape(-1, 1),                     # (H, 1)
        "w2t": w2t,                                             # (D, H)
        "b2c": b2c,                                             # (D, 1)
        "sw": ad @ w2t,                                         # (2N, H)
        "sb": ad @ b2c,                                         # (2N, 1)
    }


# ---------------------------------------------------------------------------
# Wrapper: tile selection + pallas_call (no activation pad/transpose passes).
# ---------------------------------------------------------------------------
@jax.jit
def agree_disagree_forward(i, e_q, kparams):
    """i: (B,) int indices, e_q: (B, encoder_dim) f32 -> (B, 2) [d_score, a_score]."""
    B, enc = e_q.shape
    w1t, b1c = kparams["w1t"], kparams["b1c"]
    w2t, b2c = kparams["w2t"], kparams["b2c"]
    sw, sb = kparams["sw"], kparams["sb"]
    H = w1t.shape[0]
    D = w2t.shape[0]
    N2 = sw.shape[0]

    # Biggest tile up to MAX_TILE_B, but keep >= 2 grid steps once the batch
    # spans more than one 128-lane tile (v7x: 2 TensorCores share the grid).
    b128 = ((B + 127) // 128) * 128
    tile_b = min(MAX_TILE_B, max(128, ((b128 // 2 + 127) // 128) * 128))
    grid = (pl.cdiv(B, tile_b),)

    ids = i.astype(jnp.int32).reshape(1, B)

    def pinned(shape):  # same block every grid step -> stays VMEM resident
        return pl.BlockSpec(shape, lambda b: (0, 0))

    out = pl.pallas_call(
        agree_disagree_kernel,
        out_shape=jax.ShapeDtypeStruct((2, B), jnp.float32),
        grid=grid,
        in_specs=[
            pl.BlockSpec((1, tile_b), lambda b: (0, b)),        # ids on lanes
            pl.BlockSpec((tile_b, enc), lambda b: (b, 0)),      # e_q batch-major tile
            pinned((H, enc)),                                   # W1^T
            pinned((H, 1)),                                     # b1
            pinned((D, H)),                                     # W2^T
            pinned((D, 1)),                                     # b2
            pinned((N2, H)),                                    # fused score weights
            pinned((N2, 1)),                                    # fused score bias
        ],
        out_specs=pl.BlockSpec((2, tile_b), lambda b: (0, b)),
        compiler_params=pltpu.CompilerParams(
            dimension_semantics=("parallel",),
            vmem_limit_bytes=32 * 1024 * 1024,
        ),
    )(ids, e_q, w1t, b1c, w2t, b2c, sw, sb)

    # (B, 2) with columns [d_score, a_score]  ==  torch.stack([d, a], dim=-1)
    return out.T


# ---------------------------------------------------------------------------
# Deterministic parameter init (mirrors the PyTorch __init__ shapes)
# ---------------------------------------------------------------------------
def init_params(key, num_individuals, embedding_dim, encoder_dim, hidden,
                same_weights=False):
    k1, k2, k3, k4, k5, k6 = jax.random.split(key, 6)

    bound_e = (6.0 / (num_individuals + embedding_dim)) ** 0.5   # xavier_uniform
    agree_w = jax.random.uniform(k1, (num_individuals, embedding_dim),
                                 jnp.float32, -bound_e, bound_e)
    if same_weights:
        disagree_w = agree_w
    else:
        disagree_w = jax.random.uniform(k2, (num_individuals, embedding_dim),
                                        jnp.float32, -bound_e, bound_e)

    bound1 = 1.0 / (encoder_dim ** 0.5)
    w1 = jax.random.uniform(k3, (encoder_dim, hidden), jnp.float32, -bound1, bound1)
    b1 = jax.random.uniform(k4, (1, hidden), jnp.float32, -bound1, bound1)

    bound2 = 1.0 / (hidden ** 0.5)
    w2 = jax.random.uniform(k5, (hidden, embedding_dim), jnp.float32, -bound2, bound2)
    b2 = jax.random.uniform(k6, (1, embedding_dim), jnp.float32, -bound2, bound2)

    return {"agree_weight": agree_w, "disagree_weight": disagree_w,
            "w1": w1, "b1": b1, "w2": w2, "b2": b2}


# ---------------------------------------------------------------------------
# Pure-JAX reference (mirrors the PyTorch forward) for correctness checking
# ---------------------------------------------------------------------------
def reference_forward(i, e_q, params):
    e_a = jnp.take(params["agree_weight"], i, axis=0)
    e_d = jnp.take(params["disagree_weight"], i, axis=0)
    h = jnp.maximum(e_q @ params["w1"] + params["b1"], 0.0)
    eq = h @ params["w2"] + params["b2"]
    eps = 1e-8

    def cos(a, b):
        na = jnp.maximum(jnp.linalg.norm(a, axis=-1), eps)
        nb = jnp.maximum(jnp.linalg.norm(b, axis=-1), eps)
        return jnp.sum(a * b, axis=-1) / (na * nb)

    a_score = cos(eq, e_a)
    d_score = cos(eq, e_d)
    return jnp.stack([d_score, a_score], axis=-1)


if __name__ == "__main__":
    batch = 200   # exercises a 2-step "parallel" grid with a partial last block

    key = jax.random.PRNGKey(0)
    kp, ki, kq = jax.random.split(key, 3)

    params = init_params(kp, NUM_INDIVIDUALS, EMBEDDING_DIM, ENCODER_DIM,
                         HIDDEN, same_weights=False)
    kparams = prepare_kernel_params(params)

    i = jax.random.randint(ki, (batch,), 0, NUM_INDIVIDUALS, dtype=jnp.int32)
    e_q = jax.random.normal(kq, (batch, ENCODER_DIM), dtype=jnp.float32)

    out = agree_disagree_forward(i, e_q, kparams)
    out = jax.block_until_ready(out)

    ref = reference_forward(i, e_q, params)
    assert out.shape == (batch, 2)
    assert jnp.allclose(out, ref, atol=2e-4, rtol=2e-4), (out, ref)

    print("KERNEL_OK")
</pallas_src>

<mosaic_0001>
module attributes {stable_mosaic.version = 11 : i64} {
  func.func @agree_disagree_kernel(%arg0: i32, %arg1: memref<1x128xi32, #tpu.memory_space<vmem>>, %arg2: memref<128x32xf32, #tpu.memory_space<vmem>>, %arg3: memref<64x32xf32, #tpu.memory_space<vmem>>, %arg4: memref<64x1xf32, #tpu.memory_space<vmem>>, %arg5: memref<32x64xf32, #tpu.memory_space<vmem>>, %arg6: memref<32x1xf32, #tpu.memory_space<vmem>>, %arg7: memref<32x64xf32, #tpu.memory_space<vmem>>, %arg8: memref<32x1xf32, #tpu.memory_space<vmem>>, %arg9: memref<2x128xf32, #tpu.memory_space<vmem>>) attributes {dimension_semantics = [#tpu.dimension_semantics<parallel>], iteration_bounds = array<i64: 2>, scalar_prefetch = 0 : i64, scratch_operands = 0 : i64, tpu.core_type = #tpu.core_type<tc>, window_params = [{transform_indices = @transform_0, window_bounds = array<i64: 1, 128>}, {transform_indices = @transform_1, window_bounds = array<i64: 128, 32>}, {pipeline_mode = #tpu.pipeline_mode<synchronous>, transform_indices = @transform_2, window_bounds = array<i64: 64, 32>}, {pipeline_mode = #tpu.pipeline_mode<synchronous>, transform_indices = @transform_3, window_bounds = array<i64: 64, 1>}, {pipeline_mode = #tpu.pipeline_mode<synchronous>, transform_indices = @transform_4, window_bounds = array<i64: 32, 64>}, {pipeline_mode = #tpu.pipeline_mode<synchronous>, transform_indices = @transform_5, window_bounds = array<i64: 32, 1>}, {pipeline_mode = #tpu.pipeline_mode<synchronous>, transform_indices = @transform_6, window_bounds = array<i64: 32, 64>}, {pipeline_mode = #tpu.pipeline_mode<synchronous>, transform_indices = @transform_7, window_bounds = array<i64: 32, 1>}, {transform_indices = @transform_8, window_bounds = array<i64: 2, 128>}]} {
    %c0 = arith.constant 0 : index
    %c0_0 = arith.constant 0 : index
    %0 = vector.load %arg3[%c0, %c0_0] : memref<64x32xf32, #tpu.memory_space<vmem>>, vector<64x32xf32>
    %c0_1 = arith.constant 0 : index
    %c0_2 = arith.constant 0 : index
    %1 = vector.load %arg2[%c0_1, %c0_2] : memref<128x32xf32, #tpu.memory_space<vmem>>, vector<128x32xf32>
    %cst = arith.constant dense<0.000000e+00> : vector<64x128xf32>
    %2 = tpu.matmul %0, %1, %cst {dimension_numbers = #tpu.dot_dimension_numbers<[1], [1], [0], [0], [0, 0, 1, 0], [], []>, precision = #tpu.contract_precision<fp32>} : vector<64x32xf32>, vector<128x32xf32>, vector<64x128xf32> -> vector<64x128xf32>
    %c0_3 = arith.constant 0 : index
    %c0_4 = arith.constant 0 : index
    %3 = vector.load %arg4[%c0_3, %c0_4] : memref<64x1xf32, #tpu.memory_space<vmem>>, vector<64x1xf32>
    %4 = vector.broadcast %3 : vector<64x1xf32> to vector<64x128xf32>
    %5 = arith.addf %2, %4 : vector<64x128xf32>
    %cst_5 = arith.constant 0.000000e+00 : f32
    %6 = vector.broadcast %cst_5 : f32 to vector<64x128xf32>
    %7 = arith.maximumf %5, %6 : vector<64x128xf32>
    %c0_6 = arith.constant 0 : index
    %c0_7 = arith.constant 0 : index
    %8 = vector.load %arg5[%c0_6, %c0_7] : memref<32x64xf32, #tpu.memory_space<vmem>>, vector<32x64xf32>
    %cst_8 = arith.constant dense<0.000000e+00> : vector<32x128xf32>
    %9 = tpu.matmul %8, %7, %cst_8 {dimension_numbers = #tpu.dot_dimension_numbers<[1], [0], [0], [1], [0, 0, 1, 1], [], []>, precision = #tpu.contract_precision<fp32>} : vector<32x64xf32>, vector<64x128xf32>, vector<32x128xf32> -> vector<32x128xf32>
    %c0_9 = arith.constant 0 : index
    %c0_10 = arith.constant 0 : index
    %10 = vector.load %arg6[%c0_9, %c0_10] : memref<32x1xf32, #tpu.memory_space<vmem>>, vector<32x1xf32>
    %11 = vector.broadcast %10 : vector<32x1xf32> to vector<32x128xf32>
    %12 = arith.addf %9, %11 : vector<32x128xf32>
    %c0_11 = arith.constant 0 : index
    %c0_12 = arith.constant 0 : index
    %13 = vector.load %arg7[%c0_11, %c0_12] : memref<32x64xf32, #tpu.memory_space<vmem>>, vector<32x64xf32>
    %cst_13 = arith.constant dense<0.000000e+00> : vector<32x128xf32>
    %14 = tpu.matmul %13, %7, %cst_13 {dimension_numbers = #tpu.dot_dimension_numbers<[1], [0], [0], [1], [0, 0, 1, 1], [], []>, precision = #tpu.contract_precision<fp32>} : vector<32x64xf32>, vector<64x128xf32>, vector<32x128xf32> -> vector<32x128xf32>
    %c0_14 = arith.constant 0 : index
    %c0_15 = arith.constant 0 : index
    %15 = vector.load %arg8[%c0_14, %c0_15] : memref<32x1xf32, #tpu.memory_space<vmem>>, vector<32x1xf32>
    %16 = vector.broadcast %15 : vector<32x1xf32> to vector<32x128xf32>
    %17 = arith.addf %14, %16 : vector<32x128xf32>
    %c0_16 = arith.constant 0 : index
    %c0_17 = arith.constant 0 : index
    %18 = vector.load %arg1[%c0_16, %c0_17] : memref<1x128xi32, #tpu.memory_space<vmem>>, vector<1x128xi32>
    %19 = tpu.iota {dimensions = array<i32: 0>} : vector<16x128xi32>
    %20 = vector.broadcast %18 : vector<1x128xi32> to vector<16x128xi32>
    %21 = arith.cmpi eq, %19, %20 : vector<16x128xi32>
    %22 = arith.extui %21 : vector<16x128xi1> to vector<16x128xi32>
    %23 = arith.sitofp %22 : vector<16x128xi32> to vector<16x128xf32>
    %24 = vector.extract_strided_slice %17 {offsets = [0, 0], sizes = [16, 128], strides = [1, 1]} : vector<32x128xf32> to vector<16x128xf32>
    %25 = arith.mulf %24, %23 : vector<16x128xf32>
    %cst_18 = arith.constant dense<0.000000e+00> : vector<128xf32>
    %26 = vector.multi_reduction <add>, %25, %cst_18 [0] : vector<16x128xf32> to vector<128xf32>
    %27 = vector.shape_cast %26 : vector<128xf32> to vector<1x128xf32>
    %28 = vector.extract_strided_slice %17 {offsets = [16, 0], sizes = [16, 128], strides = [1, 1]} : vector<32x128xf32> to vector<16x128xf32>
    %29 = arith.mulf %28, %23 : vector<16x128xf32>
    %cst_19 = arith.constant dense<0.000000e+00> : vector<128xf32>
    %30 = vector.multi_reduction <add>, %29, %cst_19 [0] : vector<16x128xf32> to vector<128xf32>
    %31 = vector.shape_cast %30 : vector<128xf32> to vector<1x128xf32>
    %32 = arith.mulf %12, %12 : vector<32x128xf32>
    %cst_20 = arith.constant dense<0.000000e+00> : vector<128xf32>
    %33 = vector.multi_reduction <add>, %32, %cst_20 [0] : vector<32x128xf32> to vector<128xf32>
    %34 = vector.shape_cast %33 : vector<128xf32> to vector<1x128xf32>
    %cst_21 = arith.constant 1.000000e-16 : f32
    %35 = vector.broadcast %cst_21 : f32 to vector<1x128xf32>
    %36 = arith.maximumf %34, %35 : vector<1x128xf32>
    %37 = math.rsqrt %36 : vector<1x128xf32>
    %38 = arith.mulf %31, %37 : vector<1x128xf32>
    %c0_22 = arith.constant 0 : index
    %c0_23 = arith.constant 0 : index
    %39 = vector.load %arg9[%c0_22, %c0_23] : memref<2x128xf32, #tpu.memory_space<vmem>>, vector<1x128xf32>
    tpu.vector_store %arg9[%c0_22, %c0_23], %38 {strides = array<i32>} : memref<2x128xf32, #tpu.memory_space<vmem>>, vector<1x128xf32>,
    %40 = arith.mulf %27, %37 : vector<1x128xf32>
    %c1 = arith.constant 1 : index
    %c0_24 = arith.constant 0 : index
    %41 = vector.load %arg9[%c1, %c0_24] : memref<2x128xf32, #tpu.memory_space<vmem>>, vector<1x128xf32>
    tpu.vector_store %arg9[%c1, %c0_24], %40 {strides = array<i32>} : memref<2x128xf32, #tpu.memory_space<vmem>>, vector<1x128xf32>,
    return
  }
  func.func @transform_0(%arg0: i32) -> (i32, i32) {
    %c0_i32 = arith.constant 0 : i32
    %c0_i32_0 = arith.constant 0 : i32
    return %c0_i32, %arg0 : i32, i32
  }
  func.func @transform_1(%arg0: i32) -> (i32, i32) {
    %c0_i32 = arith.constant 0 : i32
    %c0_i32_0 = arith.constant 0 : i32
    return %arg0, %c0_i32 : i32, i32
  }
  func.func @transform_2(%arg0: i32) -> (i32, i32) {
    %c0_i32 = arith.constant 0 : i32
    %c0_i32_0 = arith.constant 0 : i32
    %c0_i32_1 = arith.constant 0 : i32
    return %c0_i32, %c0_i32_0 : i32, i32
  }
  func.func @transform_3(%arg0: i32) -> (i32, i32) {
    %c0_i32 = arith.constant 0 : i32
    %c0_i32_0 = arith.constant 0 : i32
    %c0_i32_1 = arith.constant 0 : i32
    return %c0_i32, %c0_i32_0 : i32, i32
  }
  func.func @transform_4(%arg0: i32) -> (i32, i32) {
    %c0_i32 = arith.constant 0 : i32
    %c0_i32_0 = arith.constant 0 : i32
    %c0_i32_1 = arith.constant 0 : i32
    return %c0_i32, %c0_i32_0 : i32, i32
  }
  func.func @transform_5(%arg0: i32) -> (i32, i32) {
    %c0_i32 = arith.constant 0 : i32
    %c0_i32_0 = arith.constant 0 : i32
    %c0_i32_1 = arith.constant 0 : i32
    return %c0_i32, %c0_i32_0 : i32, i32
  }
  func.func @transform_6(%arg0: i32) -> (i32, i32) {
    %c0_i32 = arith.constant 0 : i32
    %c0_i32_0 = arith.constant 0 : i32
    %c0_i32_1 = arith.constant 0 : i32
    return %c0_i32, %c0_i32_0 : i32, i32
  }
  func.func @transform_7(%arg0: i32) -> (i32, i32) {
    %c0_i32 = arith.constant 0 : i32
    %c0_i32_0 = arith.constant 0 : i32
    %c0_i32_1 = arith.constant 0 : i32
    return %c0_i32, %c0_i32_0 : i32, i32
  }
  func.func @transform_8(%arg0: i32) -> (i32, i32) {
    %c0_i32 = arith.constant 0 : i32
    %c0_i32_0 = arith.constant 0 : i32
    return %c0_i32, %arg0 : i32, i32
  }
}

</mosaic_0001>

<llo_original>
// kernel: agree_disagree_forward.1
$region0: #{agree_disagree_forward.1}
  #allocation0 [shape = 'u32[]', space=smem, size = 0x4, offset = 0x4, fixed_abs, tag = 'smem constant byte address 0x4 - core index']
  #allocation1 [shape = 'u32[144,128]{1,0:T(1,128)}', space=vmem, size = 0x12000, scoped, tag = 'internal scratch']
  %s0 = inlined_call_operand.vmem [shape: s32[1,200], index: 0, kind: input, shape index: {}]
  %s1 = inlined_call_operand.vmem [shape: f32[200,32], index: 1, kind: input, shape index: {}]
  %s2 = inlined_call_operand.vmem [shape: f32[64,32], index: 2, kind: input, shape index: {}]
  %s3 = inlined_call_operand.vmem [shape: f32[64,1], index: 3, kind: input, shape index: {}]
  %s4 = inlined_call_operand.vmem [shape: f32[32,64], index: 4, kind: input, shape index: {}]
  %s5 = inlined_call_operand.vmem [shape: f32[32,1], index: 5, kind: input, shape index: {}]
  %s6 = inlined_call_operand.vmem [shape: f32[32,64], index: 6, kind: input, shape index: {}]
  %s7 = inlined_call_operand.vmem [shape: f32[32,1], index: 7, kind: input, shape index: {}]
  %s8 = inlined_call_operand.hbm [shape: f32[2,200], index: 8, kind: output, shape index: {}]
  %s9 = sld [smem:[#allocation0]]
  $region65: #{agree_disagree_forward.1} parent=0
    _
  %s11 = ssub.s32 1, %s9
  %s12 = scalar_select 0, %s11, %s9
  $region1: #{agree_disagree_forward.1} parent=0
    #allocation2 [shape = 'u8[2048]{0}', space=vmem, size = 0x800, scoped, tag = 'output window, operand 0']
    #allocation3 [shape = 's32[2]{0}', space=sflag, size = 0x8, scoped, tag = 'scoped memory for agree_disagree_forward.1']
    %13 = vsyncpa [#allocation3], 0
    %s14 = scalar_lea.sflag [#allocation3], 1
    %15 = vsyncpa %s14, 0
    loop: start=0, step=1, limit=4
    $region2: #{agree_disagree_forward.1} parent=1 // loop_pre_header
      _
    $region3: #{agree_disagree_forward.1} parent=1 // loop_header
      %s17 = sphi 0, %s21
      %p18 = scmp.ge.s32.totalorder %s17, 4
      %s27 = sphi 0, %s29
      %s30 = sphi 0, %s27
      %s31 = sphi 0, %s30
      %s47 = sphi 0, %s31
      %s53 = sphi 0, %s55
      %s56 = sphi 0, %s53
      %s57 = sphi 0, %s56
      %s73 = sphi 0, %s57
      %s77 = sphi 0, %s77
      %s79 = sphi 0, %s77
      %s80 = sphi 0, %s79
      %s94 = sphi 0, %s80
      %s98 = sphi 0, %s98
      %s100 = sphi 0, %s98
      %s101 = sphi 0, %s100
      %s115 = sphi 0, %s101
      %s119 = sphi 0, %s119
      %s121 = sphi 0, %s119
      %s122 = sphi 0, %s121
      %s136 = sphi 0, %s122
      %s140 = sphi 0, %s140
      %s142 = sphi 0, %s140
      %s143 = sphi 0, %s142
      %s157 = sphi 0, %s143
      %s161 = sphi 0, %s161
      %s163 = sphi 0, %s161
      %s164 = sphi 0, %s163
      %s178 = sphi 0, %s164
      %s182 = sphi 0, %s182
      %s184 = sphi 0, %s182
      %s185 = sphi 0, %s184
      %s199 = sphi 0, %s185
      %s205 = sphi 0, %s207
      %s208 = sphi 0, %s205
      %s209 = sphi 0, %s208
      %s225 = sphi 0, %s209
    $region4: #{agree_disagree_forward.1} parent=1 // loop_header_branch
      %20 = sbr.rel (%p18) target = $region8
    $region5: #{agree_disagree_forward.1} parent=1 // loop_body
      %s22 = ssub.s32 %s17, 1
      %s23 = ssub.s32 %s17, 2
      %s24 = sadd.s32 %s17, 1
      %s25 = ssub.s32 %s17, %s24
      %p26 = scmp.eq.s32.totalorder %s25, 0
      %s28 = sadd.s32 %s27, 1
      %s29 = scalar_select %p26, %s27, %s28
      %p32 = pneg %p26
      %p33 = scmp.eq.s32.totalorder %s17, 1
      %p34 = por %p32, %p33
      %p35 = scmp.ne.s32.totalorder %s27, %s30
      %p36 = scmp.eq.s32.totalorder %s17, 0
      %p37 = por %p35, %p36
      %p38 = scmp.ne.s32.totalorder %s27, %s30
      %p39 = scmp.eq.s32.totalorder %s22, 1
      %p40 = por %p38, %p39
      %p41 = scmp.ne.s32.totalorder %s30, %s31
      %p42 = scmp.eq.s32.totalorder %s22, 0
      %p43 = por %p41, %p42
      %p44 = scmp.ne.s32.totalorder %s30, %s31
      %p45 = scmp.eq.s32.totalorder %s23, 1
      %p46 = por %p44, %p45
      %p48 = scmp.ne.s32.totalorder %s31, %s47
      %p49 = scmp.eq.s32.totalorder %s23, 0
      %p50 = por %p48, %p49
      %s51 = ssub.s32 %s17, %s24
      %p52 = scmp.eq.s32.totalorder %s51, 0
      %s54 = sadd.s32 %s53, 1
      %s55 = scalar_select %p52, %s53, %s54
      %p58 = pneg %p52
      %p59 = scmp.eq.s32.totalorder %s17, 1
      %p60 = por %p58, %p59
      %p61 = scmp.ne.s32.totalorder %s53, %s56
      %p62 = scmp.eq.s32.totalorder %s17, 0
      %p63 = por %p61, %p62
      %p64 = scmp.ne.s32.totalorder %s53, %s56
      %p65 = scmp.eq.s32.totalorder %s22, 1
      %p66 = por %p64, %p65
      %p67 = scmp.ne.s32.totalorder %s56, %s57
      %p68 = scmp.eq.s32.totalorder %s22, 0
      %p69 = por %p67, %p68
      %p70 = scmp.ne.s32.totalorder %s56, %s57
      %p71 = scmp.eq.s32.totalorder %s23, 1
      %p72 = por %p70, %p71
      %p74 = scmp.ne.s32.totalorder %s57, %s73
      %p75 = scmp.eq.s32.totalorder %s23, 0
      %p76 = por %p74, %p75
      %s78 = sadd.s32 %s77, 1
      %p81 = scmp.eq.s32.totalorder %s17, 1
      %p82 = scmp.ne.s32.totalorder %s77, %s79
      %p83 = scmp.eq.s32.totalorder %s17, 0
      %p84 = por %p82, %p83
      %p85 = scmp.ne.s32.totalorder %s77, %s79
      %p86 = scmp.eq.s32.totalorder %s22, 1
      %p87 = por %p85, %p86
      %p88 = scmp.ne.s32.totalorder %s79, %s80
      %p89 = scmp.eq.s32.totalorder %s22, 0
      %p90 = por %p88, %p89
      %p91 = scmp.ne.s32.totalorder %s79, %s80
      %p92 = scmp.eq.s32.totalorder %s23, 1
      %p93 = por %p91, %p92
      %p95 = scmp.ne.s32.totalorder %s80, %s94
      %p96 = scmp.eq.s32.totalorder %s23, 0
      %p97 = por %p95, %p96
      %s99 = sadd.s32 %s98, 1
      %p102 = scmp.eq.s32.totalorder %s17, 1
      %p103 = scmp.ne.s32.totalorder %s98, %s100
      %p104 = scmp.eq.s32.totalorder %s17, 0
      %p105 = por %p103, %p104
      %p106 = scmp.ne.s32.totalorder %s98, %s100
      %p107 = scmp.eq.s32.totalorder %s22, 1
      %p108 = por %p106, %p107
      %p109 = scmp.ne.s32.totalorder %s100, %s101
      %p110 = scmp.eq.s32.totalorder %s22, 0
      %p111 = por %p109, %p110
      %p112 = scmp.ne.s32.totalorder %s100, %s101
      %p113 = scmp.eq.s32.totalorder %s23, 1
      %p114 = por %p112, %p113
      %p116 = scmp.ne.s32.totalorder %s101, %s115
      %p117 = scmp.eq.s32.totalorder %s23, 0
      %p118 = por %p116, %p117
      %s120 = sadd.s32 %s119, 1
      %p123 = scmp.eq.s32.totalorder %s17, 1
      %p124 = scmp.ne.s32.totalorder %s119, %s121
      %p125 = scmp.eq.s32.totalorder %s17, 0
      %p126 = por %p124, %p125
      %p127 = scmp.ne.s32.totalorder %s119, %s121
      %p128 = scmp.eq.s32.totalorder %s22, 1
      %p129 = por %p127, %p128
      %p130 = scmp.ne.s32.totalorder %s121, %s122
      %p131 = scmp.eq.s32.totalorder %s22, 0
      %p132 = por %p130, %p131
      %p133 = scmp.ne.s32.totalorder %s121, %s122
      %p134 = scmp.eq.s32.totalorder %s23, 1
      %p135 = por %p133, %p134
      %p137 = scmp.ne.s32.totalorder %s122, %s136
      %p138 = scmp.eq.s32.totalorder %s23, 0
      %p139 = por %p137, %p138
      %s141 = sadd.s32 %s140, 1
      %p144 = scmp.eq.s32.totalorder %s17, 1
      %p145 = scmp.ne.s32.totalorder %s140, %s142
      %p146 = scmp.eq.s32.totalorder %s17, 0
      %p147 = por %p145, %p146
      %p148 = scmp.ne.s32.totalorder %s140, %s142
      %p149 = scmp.eq.s32.totalorder %s22, 1
      %p150 = por %p148, %p149
      %p151 = scmp.ne.s32.totalorder %s142, %s143
      %p152 = scmp.eq.s32.totalorder %s22, 0
      %p153 = por %p151, %p152
      %p154 = scmp.ne.s32.totalorder %s142, %s143
      %p155 = scmp.eq.s32.totalorder %s23, 1
      %p156 = por %p154, %p155
      %p158 = scmp.ne.s32.totalorder %s143, %s157
      %p159 = scmp.eq.s32.totalorder %s23, 0
      %p160 = por %p158, %p159
      %s162 = sadd.s32 %s161, 1
      %p165 = scmp.eq.s32.totalorder %s17, 1
      %p166 = scmp.ne.s32.totalorder %s161, %s163
      %p167 = scmp.eq.s32.totalorder %s17, 0
      %p168 = por %p166, %p167
      %p169 = scmp.ne.s32.totalorder %s161, %s163
      %p170 = scmp.eq.s32.totalorder %s22, 1
      %p171 = por %p169, %p170
      %p172 = scmp.ne.s32.totalorder %s163, %s164
      %p173 = scmp.eq.s32.totalorder %s22, 0
      %p174 = por %p172, %p173
      %p175 = scmp.ne.s32.totalorder %s163, %s164
      %p176 = scmp.eq.s32.totalorder %s23, 1
      %p177 = por %p175, %p176
      %p179 = scmp.ne.s32.totalorder %s164, %s178
      %p180 = scmp.eq.s32.totalorder %s23, 0
      %p181 = por %p179, %p180
      %s183 = sadd.s32 %s182, 1
      %p186 = scmp.eq.s32.totalorder %s17, 1
      %p187 = scmp.ne.s32.totalorder %s182, %s184
      %p188 = scmp.eq.s32.totalorder %s17, 0
      %p189 = por %p187, %p188
      %p190 = scmp.ne.s32.totalorder %s182, %s184
      %p191 = scmp.eq.s32.totalorder %s22, 1
      %p192 = por %p190, %p191
      %p193 = scmp.ne.s32.totalorder %s184, %s185
      %p194 = scmp.eq.s32.totalorder %s22, 0
      %p195 = por %p193, %p194
      %p196 = scmp.ne.s32.totalorder %s184, %s185
      %p197 = scmp.eq.s32.totalorder %s23, 1
      %p198 = por %p196, %p197
      %p200 = scmp.ne.s32.totalorder %s185, %s199
      %p201 = scmp.eq.s32.totalorder %s23, 0
      %p202 = por %p200, %p201
      %s203 = ssub.s32 %s17, %s24
      %p204 = scmp.eq.s32.totalorder %s203, 0
      %s206 = sadd.s32 %s205, 1
      %s207 = scalar_select %p204, %s205, %s206
      %p210 = pneg %p204
      %p211 = scmp.eq.s32.totalorder %s17, 1
      %p212 = por %p210, %p211
      %p213 = scmp.ne.s32.totalorder %s205, %s208
      %p214 = scmp.eq.s32.totalorder %s17, 0
      %p215 = por %p213, %p214
      %p216 = scmp.ne.s32.totalorder %s205, %s208
      %p217 = scmp.eq.s32.totalorder %s22, 1
      %p218 = por %p216, %p217
      %p219 = scmp.ne.s32.totalorder %s208, %s209
      %p220 = scmp.eq.s32.totalorder %s22, 0
      %p221 = por %p219, %p220
      %p222 = scmp.ne.s32.totalorder %s208, %s209
      %p223 = scmp.eq.s32.totalorder %s23, 1
      %p224 = por %p222, %p223
      %p226 = scmp.ne.s32.totalorder %s209, %s225
      %p227 = scmp.eq.s32.totalorder %s23, 0
      %p228 = por %p226, %p227
      %p229 = scmp.le.s32.totalorder 1, %s17
      %p230 = scmp.lt.s32.totalorder %s17, 3
      %p231 = pnand %p229, %p230
      %p232 = pneg %p231
      // Predicated region
      $region9: #{agree_disagree_forward.1} parent=5 // pred_check
        _
      $region10: #{agree_disagree_forward.1} parent=5 // pred_check_branch
        %234 = sbr.rel (%p231) target = $region12
      $region11: #{agree_disagree_forward.1} parent=5 // pred_region
        %s235 = ssub.s32 %s17, 1
        // Predicated region
        $region13: #{agree_disagree_forward.1} parent=11 // pred_check
          %p236 = pneg %p90
        $region14: #{agree_disagree_forward.1} parent=11 // pred_check_branch
          %238 = sbr.rel (%p236) target = $region16
        $region15: #{agree_disagree_forward.1} parent=11 // pred_region
          _
        $region16: #{agree_disagree_forward.1} parent=11 // pred_fallthru
          _
        // Predicated region
        $region17: #{agree_disagree_forward.1} parent=11 // pred_check
          %p239 = pneg %p111
        $region18: #{agree_disagree_forward.1} parent=11 // pred_check_branch
          %241 = sbr.rel (%p239) target = $region20
        $region19: #{agree_disagree_forward.1} parent=11 // pred_region
          _
        $region20: #{agree_disagree_forward.1} parent=11 // pred_fallthru
          _
        // Predicated region
        $region21: #{agree_disagree_forward.1} parent=11 // pred_check
          %p242 = pneg %p132
        $region22: #{agree_disagree_forward.1} parent=11 // pred_check_branch
          %244 = sbr.rel (%p242) target = $region24
        $region23: #{agree_disagree_forward.1} parent=11 // pred_region
          _
        $region24: #{agree_disagree_forward.1} parent=11 // pred_fallthru
          _
        // Predicated region
        $region25: #{agree_disagree_forward.1} parent=11 // pred_check
          %p245 = pneg %p153
        $region26: #{agree_disagree_forward.1} parent=11 // pred_check_branch
          %247 = sbr.rel (%p245) target = $region28
        $region27: #{agree_disagree_forward.1} parent=11 // pred_region
          _
        $region28: #{agree_disagree_forward.1} parent=11 // pred_fallthru
          _
        // Predicated region
        $region29: #{agree_disagree_forward.1} parent=11 // pred_check
          %p248 = pneg %p174
        $region30: #{agree_disagree_forward.1} parent=11 // pred_check_branch
          %250 = sbr.rel (%p248) target = $region32
        $region31: #{agree_disagree_forward.1} parent=11 // pred_region
          _
        $region32: #{agree_disagree_forward.1} parent=11 // pred_fallthru
          _
        // Predicated region
        $region33: #{agree_disagree_forward.1} parent=11 // pred_check
          %p251 = pneg %p195
        $region34: #{agree_disagree_forward.1} parent=11 // pred_check_branch
          %253 = sbr.rel (%p251) target = $region36
        $region35: #{agree_disagree_forward.1} parent=11 // pred_region
          _
        $region36: #{agree_disagree_forward.1} parent=11 // pred_fallthru
          _
      $region12: #{agree_disagree_forward.1} parent=5 // pred_fallthru
        _
      %p254 = scmp.lt.s32.totalorder %s17, 2
      // Predicated region
      $region37: #{agree_disagree_forward.1} parent=5 // pred_check
        %p255 = pneg %p254
      $region38: #{agree_disagree_forward.1} parent=5 // pred_check_branch
        %257 = sbr.rel (%p255) target = $region40
      $region39: #{agree_disagree_forward.1} parent=5 // pred_region
        // Predicated region
        $region41: #{agree_disagree_forward.1} parent=39 // pred_check
          %p258 = pneg %p37
        $region42: #{agree_disagree_forward.1} parent=39 // pred_check_branch
          %260 = sbr.rel (%p258) target = $region44
        $region43: #{agree_disagree_forward.1} parent=39 // pred_region
          %p261 = scmp.lt.s32.totalorder %s17, 1
          %s262 = scalar_select %p261, %s17, 1
          %s263 = scalar_lea.vmem %s0, %s262
        $region44: #{agree_disagree_forward.1} parent=39 // pred_fallthru
          _
        // Predicated region
        $region45: #{agree_disagree_forward.1} parent=39 // pred_check
          %p264 = pneg %p63
        $region46: #{agree_disagree_forward.1} parent=39 // pred_check_branch
          %266 = sbr.rel (%p264) target = $region48
        $region47: #{agree_disagree_forward.1} parent=39 // pred_region
          %s267 = smul.u32 16, %s17
          %s268 = ssub.s32 25, %s267
          %p269 = scmp.lt.s32.totalorder %s268, 16
          %s270 = scalar_select %p269, %s268, 16
          %s271 = smul.u32 128, %s270
          %p272 = scmp.lt.s32.totalorder %s267, 24
          %s273 = scalar_select %p272, %s267, 24
          %s274 = smul.addr %s273, 8
          %s275 = scalar_lea.vmem %s1, %s274
          %s276 = smul.u32 16, %s17
          %s277 = ssub.s32 25, %s276
          %p278 = scmp.lt.s32.totalorder %s277, 16
          %s279 = scalar_select %p278, %s277, 16
          %s280 = smul.u32 128, %s279
        $region48: #{agree_disagree_forward.1} parent=39 // pred_fallthru
          _
      $region40: #{agree_disagree_forward.1} parent=5 // pred_fallthru
        _
      %p281 = scmp.le.s32.totalorder 1, %s17
      %p282 = scmp.lt.s32.totalorder %s17, 3
      %p283 = pnand %p281, %p282
      %p284 = pneg %p283
      // Predicated region
      $region49: #{agree_disagree_forward.1} parent=5 // pred_check
        _
      $region50: #{agree_disagree_forward.1} parent=5 // pred_check_branch
        %286 = sbr.rel (%p283) target = $region52
      $region51: #{agree_disagree_forward.1} parent=5 // pred_region
        %s287 = ssub.s32 %s17, 1
        %p288 = scmp.lt.s32.totalorder %s22, 1
        %s289 = scalar_select %p288, %s22, 1
        %s290 = scalar_lea.vmem %s0, %s289
        %p291 = pneg %p43
        %p292 = pneg %p40
        %s293 = smul.u32 16, %s22
        %s294 = ssub.s32 25, %s293
        %p295 = scmp.lt.s32.totalorder %s294, 16
        %s296 = scalar_select %p295, %s294, 16
        %s297 = smul.u32 128, %s296
        %p298 = scmp.lt.s32.totalorder %s293, 24
        %s299 = scalar_select %p298, %s293, 24
        %s300 = smul.addr %s299, 8
        %s301 = scalar_lea.vmem %s1, %s300
        %p302 = pneg %p69
        %p303 = pneg %p66
        %p304 = pneg %p90
        %p305 = pneg %p87
        %p306 = pneg %p111
        %p307 = pneg %p108
        %p308 = pneg %p132
        %p309 = pneg %p129
        %p310 = pneg %p153
        %p311 = pneg %p150
        %p312 = pneg %p174
        %p313 = pneg %p171
        %p314 = pneg %p195
        %p315 = pneg %p192
        %p316 = pneg %p221
        %p317 = pneg %p218
        %s318 = sand.u32 %s208, 1
        %s319 = scalar_lea.sflag [#allocation3], %s318
        %s320 = sand.u32 %s208, 1
        %s321 = smul.addr %s320, 2
        %s322 = scalar_lea.vmem [#allocation2], %s321
        %p323 = scmp.lt.s32.totalorder %s22, 1
        %s324 = scalar_select %p323, %s22, 1
        %s325 = scalar_lea.vmem %s0, %s324
        %s326 = smul.u32 16, %s22
        %s327 = ssub.s32 25, %s326
        %p328 = scmp.lt.s32.totalorder %s327, 16
        %s329 = scalar_select %p328, %s327, 16
        %s330 = smul.u32 128, %s329
        %p331 = scmp.lt.s32.totalorder %s326, 24
        %s332 = scalar_select %p331, %s326, 24
        %s333 = smul.addr %s332, 8
        %s334 = scalar_lea.vmem %s1, %s333
        %s335 = smul.u32 16, %s22
        %s336 = ssub.s32 25, %s335
        %p337 = scmp.lt.s32.totalorder %s336, 16
        %s338 = scalar_select %p337, %s336, 16
        %s339 = smul.u32 128, %s338
        %v340 = vld [vmem:[%s2] sm:$0xff]
        %v341 = vld [vmem:[%s2 + $0x8] sm:$0xff]
        %v342 = vld [vmem:[%s2 + $0x10] sm:$0xff]
        %v343 = vld [vmem:[%s2 + $0x18] sm:$0xff]
        %v344 = vld [vmem:[%s2 + $0x20] sm:$0xff]
        %v345 = vld [vmem:[%s2 + $0x28] sm:$0xff]
        %v346 = vld [vmem:[%s2 + $0x30] sm:$0xff]
        %v347 = vld [vmem:[%s2 + $0x38] sm:$0xff]
        %v348 = vld [vmem:[%s334] sm:$0xff]
        %v349 = vld [vmem:[%s334 + $0x8] sm:$0xff]
        %v350 = vld [vmem:[%s334 + $0x10] sm:$0xff]
        %v351 = vld [vmem:[%s334 + $0x18] sm:$0xff]
        %v352 = vld [vmem:[%s334 + $0x20] sm:$0xff]
        %v353 = vld [vmem:[%s334 + $0x28] sm:$0xff]
        %v354 = vld [vmem:[%s334 + $0x30] sm:$0xff]
        %v355 = vld [vmem:[%s334 + $0x38] sm:$0xff]
        %v356 = vld [vmem:[%s334 + $0x40] sm:$0xff]
        %v357 = vld [vmem:[%s334 + $0x48] sm:$0xff]
        %v358 = vld [vmem:[%s334 + $0x50] sm:$0xff]
        %v359 = vld [vmem:[%s334 + $0x58] sm:$0xff]
        %v360 = vld [vmem:[%s334 + $0x60] sm:$0xff]
        %v361 = vld [vmem:[%s334 + $0x68] sm:$0xff]
        %v362 = vld [vmem:[%s334 + $0x70] sm:$0xff]
        %v363 = vld [vmem:[%s334 + $0x78] sm:$0xff]
        %v364 = vld [vmem:[%s3] sm:$0xff]
        %v365 = vld [vmem:[%s3 + $0x8] sm:$0xff]
        %v366 = vld [vmem:[%s3 + $0x10] sm:$0xff]
        %v367 = vld [vmem:[%s3 + $0x18] sm:$0xff]
        %v368 = vld [vmem:[%s3 + $0x20] sm:$0xff]
        %v369 = vld [vmem:[%s3 + $0x28] sm:$0xff]
        %v370 = vld [vmem:[%s3 + $0x30] sm:$0xff]
        %v371 = vld [vmem:[%s3 + $0x38] sm:$0xff]
        %373 = vset.pattern.permute.xlu0 0
        %374 = vperm.xlu0 %373, %v364
        %v375 = vpop.permute.xlu0 %374
        %378 = vset.pattern.permute.xlu0 0
        %379 = vperm.xlu0 %378, %v365
        %v380 = vpop.permute.xlu0 %379
        %383 = vset.pattern.permute.xlu0 0
        %384 = vperm.xlu0 %383, %v366
        %v385 = vpop.permute.xlu0 %384
        %388 = vset.pattern.permute.xlu0 0
        %389 = vperm.xlu0 %388, %v367
        %v390 = vpop.permute.xlu0 %389
        %393 = vset.pattern.permute.xlu0 0
        %394 = vperm.xlu0 %393, %v368
        %v395 = vpop.permute.xlu0 %394
        %398 = vset.pattern.permute.xlu0 0
        %399 = vperm.xlu0 %398, %v369
        %v400 = vpop.permute.xlu0 %399
        %403 = vset.pattern.permute.xlu0 0
        %404 = vperm.xlu0 %403, %v370
        %v405 = vpop.permute.xlu0 %404
        %408 = vset.pattern.permute.xlu0 0
        %409 = vperm.xlu0 %408, %v371
        %v410 = vpop.permute.xlu0 %409
        %vm412 = vcmask 261120
        %v414 = vsel %vm412, %v340, 0
        %v417 = vsel %vm412, %v341, 0
        %v420 = vsel %vm412, %v342, 0
        %v423 = vsel %vm412, %v343, 0
        %v426 = vsel %vm412, %v344, 0
        %v429 = vsel %vm412, %v345, 0
        %v432 = vsel %vm412, %v346, 0
        %v435 = vsel %vm412, %v347, 0
        %v438 = vsel %vm412, %v348, 0
        %v441 = vsel %vm412, %v349, 0
        %v444 = vsel %vm412, %v350, 0
        %v447 = vsel %vm412, %v351, 0
        %v450 = vsel %vm412, %v352, 0
        %v453 = vsel %vm412, %v353, 0
        %v456 = vsel %vm412, %v354, 0
        %v459 = vsel %vm412, %v355, 0
        %v462 = vsel %vm412, %v356, 0
        %v465 = vsel %vm412, %v357, 0
        %v468 = vsel %vm412, %v358, 0
        %v471 = vsel %vm412, %v359, 0
        %v474 = vsel %vm412, %v360, 0
        %v477 = vsel %vm412, %v361, 0
        %v480 = vsel %vm412, %v362, 0
        %v483 = vsel %vm412, %v363, 0
        %485 = vmatprep.subr.mxu0 0.0
        %v486 = vand.u32 %v483, 4294901760
        %487 = vmatpush1.xpose.msra.mxu0 %v486
        %488 = vmatprep.subr.mxu0 0.0
        %v489 = vand.u32 %v480, 4294901760
        %490 = vmatpush1.xpose.msra.mxu0 %v489
        %491 = vmatprep.subr.mxu0 0.0
        %v492 = vand.u32 %v477, 4294901760
        %493 = vmatpush1.xpose.msra.mxu0 %v492
        %494 = vmatprep.subr.mxu0 0.0
        %v495 = vand.u32 %v474, 4294901760
        %496 = vmatpush1.xpose.msra.mxu0 %v495
        %497 = vmatprep.subr.mxu0 0.0
        %v498 = vand.u32 %v471, 4294901760
        %499 = vmatpush1.xpose.msra.mxu0 %v498
        %500 = vmatprep.subr.mxu0 0.0
        %v501 = vand.u32 %v468, 4294901760
        %502 = vmatpush1.xpose.msra.mxu0 %v501
        %503 = vmatprep.subr.mxu0 0.0
        %v504 = vand.u32 %v465, 4294901760
        %505 = vmatpush1.xpose.msra.mxu0 %v504
        %506 = vmatprep.subr.mxu0 0.0
        %v507 = vand.u32 %v462, 4294901760
        %508 = vmatpush1.xpose.msra.mxu0 %v507
        %509 = vmatprep.subr.mxu0 0.0
        %v510 = vand.u32 %v459, 4294901760
        %511 = vmatpush1.xpose.msra.mxu0 %v510
        %512 = vmatprep.subr.mxu0 0.0
        %v513 = vand.u32 %v456, 4294901760
        %514 = vmatpush1.xpose.msra.mxu0 %v513
        %515 = vmatprep.subr.mxu0 0.0
        %v516 = vand.u32 %v453, 4294901760
        %517 = vmatpush1.xpose.msra.mxu0 %v516
        %518 = vmatprep.subr.mxu0 0.0
        %v519 = vand.u32 %v450, 4294901760
        %520 = vmatpush1.xpose.msra.mxu0 %v519
        %521 = vmatprep.subr.mxu0 0.0
        %v522 = vand.u32 %v447, 4294901760
        %523 = vmatpush1.xpose.msra.mxu0 %v522
        %524 = vmatprep.subr.mxu0 0.0
        %v525 = vand.u32 %v444, 4294901760
        %526 = vmatpush1.xpose.msra.mxu0 %v525
        %527 = vmatprep.subr.mxu0 0.0
        %v528 = vand.u32 %v441, 4294901760
        %529 = vmatpush1.xpose.msra.mxu0 %v528
        %530 = vmatprep.subr.mxu0 0.0
        %v531 = vand.u32 %v438, 4294901760
        %532 = vmatpush1.xpose.msra.mxu0 %v531
        %533 = vmatprep.subr.mxu0 0.0
        %534 = vmatpush2.xpose.msra.mxu0 0.0
        %535 = vmatprep.subr.mxu0 0.0
        %536 = vmatpush2.xpose.msra.mxu0 0.0
        %537 = vmatprep.subr.mxu0 0.0
        %538 = vmatpush2.xpose.msra.mxu0 0.0
        %539 = vmatprep.subr.mxu0 0.0
        %540 = vmatpush2.xpose.msra.mxu0 0.0
        %541 = vmatprep.subr.mxu0 0.0
        %542 = vmatpush2.xpose.msra.mxu0 0.0
        %543 = vmatprep.subr.mxu0 0.0
        %544 = vmatpush2.xpose.msra.mxu0 0.0
        %545 = vmatprep.subr.mxu0 0.0
        %546 = vmatpush2.xpose.msra.mxu0 0.0
        %547 = vmatprep.subr.mxu0 0.0
        %548 = vmatpush2.xpose.msra.mxu0 0.0
        %549 = vmatprep.subr.mxu0 0.0
        %550 = vmatpush2.xpose.msra.mxu0 0.0
        %551 = vmatprep.subr.mxu0 0.0
        %552 = vmatpush2.xpose.msra.mxu0 0.0
        %553 = vmatprep.subr.mxu0 0.0
        %554 = vmatpush2.xpose.msra.mxu0 0.0
        %555 = vmatprep.subr.mxu0 0.0
        %556 = vmatpush2.xpose.msra.mxu0 0.0
        %557 = vmatprep.subr.mxu0 0.0
        %558 = vmatpush2.xpose.msra.mxu0 0.0
        %559 = vmatprep.subr.mxu0 0.0
        %560 = vmatpush2.xpose.msra.mxu0 0.0
        %561 = vmatprep.subr.mxu0 0.0
        %562 = vmatpush2.xpose.msra.mxu0 0.0
        %563 = vmatprep.subr.mxu0 0.0
        %564 = vmatpush2.xpose.msra.mxu0 0.0
        %565 = vmatprep.mubr.f32.mxu0 0.0
        %v566 = vand.u32 %v414, 4294901760
        %v567 = vsub.f32 %v414, %v566
        %v568 = vand.u32 %v567, 4294901760
        %v569 = vsub.f32 %v567, %v568
        %v570 = vand.u32 %v569, 4294901760
        %571 = vmatmul.mubr.f32.gmra.mxu0 %v570
        %v572 = vpop.f32.mrf.mxu0
        %v573 = vadd.f32 %v375, %v572
        %v574 = vpop.f32.mrf.mxu0
        %575 = vmatprep.mubr.f32.mxu0 0.0
        %v576 = vand.u32 %v417, 4294901760
        %v577 = vsub.f32 %v417, %v576
        %v578 = vand.u32 %v577, 4294901760
        %v579 = vsub.f32 %v577, %v578
        %v580 = vand.u32 %v579, 4294901760
        %581 = vmatmul.mubr.f32.gmra.mxu0 %v580
        %v582 = vpop.f32.mrf.mxu0
        %v583 = vadd.f32 %v380, %v582
        %v584 = vpop.f32.mrf.mxu0
        %585 = vmatprep.mubr.f32.mxu0 0.0
        %v586 = vand.u32 %v420, 4294901760
        %v587 = vsub.f32 %v420, %v586
        %v588 = vand.u32 %v587, 4294901760
        %v589 = vsub.f32 %v587, %v588
        %v590 = vand.u32 %v589, 4294901760
        %591 = vmatmul.mubr.f32.gmra.mxu0 %v590
        %v592 = vpop.f32.mrf.mxu0
        %v593 = vadd.f32 %v385, %v592
        %v594 = vpop.f32.mrf.mxu0
        %595 = vmatprep.mubr.f32.mxu0 0.0
        %v596 = vand.u32 %v423, 4294901760
        %v597 = vsub.f32 %v423, %v596
        %v598 = vand.u32 %v597, 4294901760
        %v599 = vsub.f32 %v597, %v598
        %v600 = vand.u32 %v599, 4294901760
        %601 = vmatmul.mubr.f32.gmra.mxu0 %v600
        %v602 = vpop.f32.mrf.mxu0
        %v603 = vadd.f32 %v390, %v602
        %v604 = vpop.f32.mrf.mxu0
        %605 = vmatprep.mubr.f32.mxu0 0.0
        %v606 = vand.u32 %v426, 4294901760
        %v607 = vsub.f32 %v426, %v606
        %v608 = vand.u32 %v607, 4294901760
        %v609 = vsub.f32 %v607, %v608
        %v610 = vand.u32 %v609, 4294901760
        %611 = vmatmul.mubr.f32.gmra.mxu0 %v610
        %v612 = vpop.f32.mrf.mxu0
        %v613 = vadd.f32 %v395, %v612
        %v614 = vpop.f32.mrf.mxu0
        %615 = vmatprep.mubr.f32.mxu0 0.0
        %v616 = vand.u32 %v429, 4294901760
        %v617 = vsub.f32 %v429, %v616
        %v618 = vand.u32 %v617, 4294901760
        %v619 = vsub.f32 %v617, %v618
        %v620 = vand.u32 %v619, 4294901760
        %621 = vmatmul.mubr.f32.gmra.mxu0 %v620
        %v622 = vpop.f32.mrf.mxu0
        %v623 = vadd.f32 %v400, %v622
        %v624 = vpop.f32.mrf.mxu0
        %625 = vmatprep.mubr.f32.mxu0 0.0
        %v626 = vand.u32 %v432, 4294901760
        %v627 = vsub.f32 %v432, %v626
        %v628 = vand.u32 %v627, 4294901760
        %v629 = vsub.f32 %v627, %v628
        %v630 = vand.u32 %v629, 4294901760
        %631 = vmatmul.mubr.f32.gmra.mxu0 %v630
        %v632 = vpop.f32.mrf.mxu0
        %v633 = vadd.f32 %v405, %v632
        %v634 = vpop.f32.mrf.mxu0
        %635 = vmatprep.mubr.f32.mxu0 0.0
        %v636 = vand.u32 %v435, 4294901760
        %v637 = vsub.f32 %v435, %v636
        %v638 = vand.u32 %v637, 4294901760
        %v639 = vsub.f32 %v637, %v638
        %v640 = vand.u32 %v639, 4294901760
        %641 = vmatmul.mubr.f32.gmra.mxu0 %v640
        %v642 = vpop.f32.mrf.mxu0
        %v643 = vadd.f32 %v410, %v642
        %v644 = vpop.f32.mrf.mxu0
        %645 = vdwg.mxu0
        %646 = vmatprep.subr.mxu0 0.0
        %v647 = vand.u32 %v483, 4294901760
        %v648 = vsub.f32 %v483, %v647
        %v649 = vand.u32 %v648, 4294901760
        %v650 = vsub.f32 %v648, %v649
        %v651 = vand.u32 %v650, 4294901760
        %652 = vmatpush1.xpose.msra.mxu0 %v651
        %653 = vmatprep.subr.mxu0 0.0
        %v654 = vand.u32 %v480, 4294901760
        %v655 = vsub.f32 %v480, %v654
        %v656 = vand.u32 %v655, 4294901760
        %v657 = vsub.f32 %v655, %v656
        %v658 = vand.u32 %v657, 4294901760
        %659 = vmatpush1.xpose.msra.mxu0 %v658
        %660 = vmatprep.subr.mxu0 0.0
        %v661 = vand.u32 %v477, 4294901760
        %v662 = vsub.f32 %v477, %v661
        %v663 = vand.u32 %v662, 4294901760
        %v664 = vsub.f32 %v662, %v663
        %v665 = vand.u32 %v664, 4294901760
        %666 = vmatpush1.xpose.msra.mxu0 %v665
        %667 = vmatprep.subr.mxu0 0.0
        %v668 = vand.u32 %v474, 4294901760
        %v669 = vsub.f32 %v474, %v668
        %v670 = vand.u32 %v669, 4294901760
        %v671 = vsub.f32 %v669, %v670
        %v672 = vand.u32 %v671, 4294901760
        %673 = vmatpush1.xpose.msra.mxu0 %v672
        %674 = vmatprep.subr.mxu0 0.0
        %v675 = vand.u32 %v471, 4294901760
        %v676 = vsub.f32 %v471, %v675
        %v677 = vand.u32 %v676, 4294901760
        %v678 = vsub.f32 %v676, %v677
        %v679 = vand.u32 %v678, 4294901760
        %680 = vmatpush1.xpose.msra.mxu0 %v679
        %681 = vmatprep.subr.mxu0 0.0
        %v682 = vand.u32 %v468, 4294901760
        %v683 = vsub.f32 %v468, %v682
        %v684 = vand.u32 %v683, 4294901760
        %v685 = vsub.f32 %v683, %v684
        %v686 = vand.u32 %v685, 4294901760
        %687 = vmatpush1.xpose.msra.mxu0 %v686
        %688 = vmatprep.subr.mxu0 0.0
        %v689 = vand.u32 %v465, 4294901760
        %v690 = vsub.f32 %v465, %v689
        %v691 = vand.u32 %v690, 4294901760
        %v692 = vsub.f32 %v690, %v691
        %v693 = vand.u32 %v692, 4294901760
        %694 = vmatpush1.xpose.msra.mxu0 %v693
        %695 = vmatprep.subr.mxu0 0.0
        %v696 = vand.u32 %v462, 4294901760
        %v697 = vsub.f32 %v462, %v696
        %v698 = vand.u32 %v697, 4294901760
        %v699 = vsub.f32 %v697, %v698
        %v700 = vand.u32 %v699, 4294901760
        %701 = vmatpush1.xpose.msra.mxu0 %v700
        %702 = vmatprep.subr.mxu0 0.0
        %v703 = vand.u32 %v459, 4294901760
        %v704 = vsub.f32 %v459, %v703
        %v705 = vand.u32 %v704, 4294901760
        %v706 = vsub.f32 %v704, %v705
        %v707 = vand.u32 %v706, 4294901760
        %708 = vmatpush1.xpose.msra.mxu0 %v707
        %709 = vmatprep.subr.mxu0 0.0
        %v710 = vand.u32 %v456, 4294901760
        %v711 = vsub.f32 %v456, %v710
        %v712 = vand.u32 %v711, 4294901760
        %v713 = vsub.f32 %v711, %v712
        %v714 = vand.u32 %v713, 4294901760
        %715 = vmatpush1.xpose.msra.mxu0 %v714
        %716 = vmatprep.subr.mxu0 0.0
        %v717 = vand.u32 %v453, 4294901760
        %v718 = vsub.f32 %v453, %v717
        %v719 = vand.u32 %v718, 4294901760
        %v720 = vsub.f32 %v718, %v719
        %v721 = vand.u32 %v720, 4294901760
        %722 = vmatpush1.xpose.msra.mxu0 %v721
        %723 = vmatprep.subr.mxu0 0.0
        %v724 = vand.u32 %v450, 4294901760
        %v725 = vsub.f32 %v450, %v724
        %v726 = vand.u32 %v725, 4294901760
        %v727 = vsub.f32 %v725, %v726
        %v728 = vand.u32 %v727, 4294901760
        %729 = vmatpush1.xpose.msra.mxu0 %v728
        %730 = vmatprep.subr.mxu0 0.0
        %v731 = vand.u32 %v447, 4294901760
        %v732 = vsub.f32 %v447, %v731
        %v733 = vand.u32 %v732, 4294901760
        %v734 = vsub.f32 %v732, %v733
        %v735 = vand.u32 %v734, 4294901760
        %736 = vmatpush1.xpose.msra.mxu0 %v735
        %737 = vmatprep.subr.mxu0 0.0
        %v738 = vand.u32 %v444, 4294901760
        %v739 = vsub.f32 %v444, %v738
        %v740 = vand.u32 %v739, 4294901760
        %v741 = vsub.f32 %v739, %v740
        %v742 = vand.u32 %v741, 4294901760
        %743 = vmatpush1.xpose.msra.mxu0 %v742
        %744 = vmatprep.subr.mxu0 0.0
        %v745 = vand.u32 %v441, 4294901760
        %v746 = vsub.f32 %v441, %v745
        %v747 = vand.u32 %v746, 4294901760
        %v748 = vsub.f32 %v746, %v747
        %v749 = vand.u32 %v748, 4294901760
        %750 = vmatpush1.xpose.msra.mxu0 %v749
        %751 = vmatprep.subr.mxu0 0.0
        %v752 = vand.u32 %v438, 4294901760
        %v753 = vsub.f32 %v438, %v752
        %v754 = vand.u32 %v753, 4294901760
        %v755 = vsub.f32 %v753, %v754
        %v756 = vand.u32 %v755, 4294901760
        %757 = vmatpush1.xpose.msra.mxu0 %v756
        %758 = vmatprep.subr.mxu0 0.0
        %759 = vmatpush2.xpose.msra.mxu0 0.0
        %760 = vmatprep.subr.mxu0 0.0
        %761 = vmatpush2.xpose.msra.mxu0 0.0
        %762 = vmatprep.subr.mxu0 0.0
        %763 = vmatpush2.xpose.msra.mxu0 0.0
        %764 = vmatprep.subr.mxu0 0.0
        %765 = vmatpush2.xpose.msra.mxu0 0.0
        %766 = vmatprep.subr.mxu0 0.0
        %767 = vmatpush2.xpose.msra.mxu0 0.0
        %768 = vmatprep.subr.mxu0 0.0
        %769 = vmatpush2.xpose.msra.mxu0 0.0
        %770 = vmatprep.subr.mxu0 0.0
        %771 = vmatpush2.xpose.msra.mxu0 0.0
        %772 = vmatprep.subr.mxu0 0.0
        %773 = vmatpush2.xpose.msra.mxu0 0.0
        %774 = vmatprep.subr.mxu0 0.0
        %775 = vmatpush2.xpose.msra.mxu0 0.0
        %776 = vmatprep.subr.mxu0 0.0
        %777 = vmatpush2.xpose.msra.mxu0 0.0
        %778 = vmatprep.subr.mxu0 0.0
        %779 = vmatpush2.xpose.msra.mxu0 0.0
        %780 = vmatprep.subr.mxu0 0.0
        %781 = vmatpush2.xpose.msra.mxu0 0.0
        %782 = vmatprep.subr.mxu0 0.0
        %783 = vmatpush2.xpose.msra.mxu0 0.0
        %784 = vmatprep.subr.mxu0 0.0
        %785 = vmatpush2.xpose.msra.mxu0 0.0
        %786 = vmatprep.subr.mxu0 0.0
        %787 = vmatpush2.xpose.msra.mxu0 0.0
        %788 = vmatprep.subr.mxu0 0.0
        %789 = vmatpush2.xpose.msra.mxu0 0.0
        %790 = vmatprep.mubr.f32.mxu0 0.0
        %v791 = vand.u32 %v414, 4294901760
        %792 = vmatmul.mubr.f32.gmra.mxu0 %v791
        %v793 = vpop.f32.mrf.mxu0
        %v794 = vadd.f32 %v573, %v793
        %v795 = vpop.f32.mrf.mxu0
        %796 = vmatprep.mubr.f32.mxu0 0.0
        %v797 = vand.u32 %v417, 4294901760
        %798 = vmatmul.mubr.f32.gmra.mxu0 %v797
        %v799 = vpop.f32.mrf.mxu0
        %v800 = vadd.f32 %v583, %v799
        %v801 = vpop.f32.mrf.mxu0
        %802 = vmatprep.mubr.f32.mxu0 0.0
        %v803 = vand.u32 %v420, 4294901760
        %804 = vmatmul.mubr.f32.gmra.mxu0 %v803
        %v805 = vpop.f32.mrf.mxu0
        %v806 = vadd.f32 %v593, %v805
        %v807 = vpop.f32.mrf.mxu0
        %808 = vmatprep.mubr.f32.mxu0 0.0
        %v809 = vand.u32 %v423, 4294901760
        %810 = vmatmul.mubr.f32.gmra.mxu0 %v809
        %v811 = vpop.f32.mrf.mxu0
        %v812 = vadd.f32 %v603, %v811
        %v813 = vpop.f32.mrf.mxu0
        %814 = vmatprep.mubr.f32.mxu0 0.0
        %v815 = vand.u32 %v426, 4294901760
        %816 = vmatmul.mubr.f32.gmra.mxu0 %v815
        %v817 = vpop.f32.mrf.mxu0
        %v818 = vadd.f32 %v613, %v817
        %v819 = vpop.f32.mrf.mxu0
        %820 = vmatprep.mubr.f32.mxu0 0.0
        %v821 = vand.u32 %v429, 4294901760
        %822 = vmatmul.mubr.f32.gmra.mxu0 %v821
        %v823 = vpop.f32.mrf.mxu0
        %v824 = vadd.f32 %v623, %v823
        %v825 = vpop.f32.mrf.mxu0
        %826 = vmatprep.mubr.f32.mxu0 0.0
        %v827 = vand.u32 %v432, 4294901760
        %828 = vmatmul.mubr.f32.gmra.mxu0 %v827
        %v829 = vpop.f32.mrf.mxu0
        %v830 = vadd.f32 %v633, %v829
        %v831 = vpop.f32.mrf.mxu0
        %832 = vmatprep.mubr.f32.mxu0 0.0
        %v833 = vand.u32 %v435, 4294901760
        %834 = vmatmul.mubr.f32.gmra.mxu0 %v833
        %v835 = vpop.f32.mrf.mxu0
        %v836 = vadd.f32 %v643, %v835
        %v837 = vpop.f32.mrf.mxu0
        %838 = vdwg.mxu0
        %839 = vmatprep.subr.mxu0 0.0
        %v840 = vand.u32 %v483, 4294901760
        %v841 = vsub.f32 %v483, %v840
        %842 = vmatpush1.xpose.msra.mxu0 %v841
        %843 = vmatprep.subr.mxu0 0.0
        %v844 = vand.u32 %v480, 4294901760
        %v845 = vsub.f32 %v480, %v844
        %846 = vmatpush1.xpose.msra.mxu0 %v845
        %847 = vmatprep.subr.mxu0 0.0
        %v848 = vand.u32 %v477, 4294901760
        %v849 = vsub.f32 %v477, %v848
        %850 = vmatpush1.xpose.msra.mxu0 %v849
        %851 = vmatprep.subr.mxu0 0.0
        %v852 = vand.u32 %v474, 4294901760
        %v853 = vsub.f32 %v474, %v852
        %854 = vmatpush1.xpose.msra.mxu0 %v853
        %855 = vmatprep.subr.mxu0 0.0
        %v856 = vand.u32 %v471, 4294901760
        %v857 = vsub.f32 %v471, %v856
        %858 = vmatpush1.xpose.msra.mxu0 %v857
        %859 = vmatprep.subr.mxu0 0.0
        %v860 = vand.u32 %v468, 4294901760
        %v861 = vsub.f32 %v468, %v860
        %862 = vmatpush1.xpose.msra.mxu0 %v861
        %863 = vmatprep.subr.mxu0 0.0
        %v864 = vand.u32 %v465, 4294901760
        %v865 = vsub.f32 %v465, %v864
        %866 = vmatpush1.xpose.msra.mxu0 %v865
        %867 = vmatprep.subr.mxu0 0.0
        %v868 = vand.u32 %v462, 4294901760
        %v869 = vsub.f32 %v462, %v868
        %870 = vmatpush1.xpose.msra.mxu0 %v869
        %871 = vmatprep.subr.mxu0 0.0
        %v872 = vand.u32 %v459, 4294901760
        %v873 = vsub.f32 %v459, %v872
        %874 = vmatpush1.xpose.msra.mxu0 %v873
        %875 = vmatprep.subr.mxu0 0.0
        %v876 = vand.u32 %v456, 4294901760
        %v877 = vsub.f32 %v456, %v876
        %878 = vmatpush1.xpose.msra.mxu0 %v877
        %879 = vmatprep.subr.mxu0 0.0
        %v880 = vand.u32 %v453, 4294901760
        %v881 = vsub.f32 %v453, %v880
        %882 = vmatpush1.xpose.msra.mxu0 %v881
        %883 = vmatprep.subr.mxu0 0.0
        %v884 = vand.u32 %v450, 4294901760
        %v885 = vsub.f32 %v450, %v884
        %886 = vmatpush1.xpose.msra.mxu0 %v885
        %887 = vmatprep.subr.mxu0 0.0
        %v888 = vand.u32 %v447, 4294901760
        %v889 = vsub.f32 %v447, %v888
        %890 = vmatpush1.xpose.msra.mxu0 %v889
        %891 = vmatprep.subr.mxu0 0.0
        %v892 = vand.u32 %v444, 4294901760
        %v893 = vsub.f32 %v444, %v892
        %894 = vmatpush1.xpose.msra.mxu0 %v893
        %895 = vmatprep.subr.mxu0 0.0
        %v896 = vand.u32 %v441, 4294901760
        %v897 = vsub.f32 %v441, %v896
        %898 = vmatpush1.xpose.msra.mxu0 %v897
        %899 = vmatprep.subr.mxu0 0.0
        %v900 = vand.u32 %v438, 4294901760
        %v901 = vsub.f32 %v438, %v900
        %902 = vmatpush1.xpose.msra.mxu0 %v901
        %903 = vmatprep.subr.mxu0 0.0
        %904 = vmatpush2.xpose.msra.mxu0 0.0
        %905 = vmatprep.subr.mxu0 0.0
        %906 = vmatpush2.xpose.msra.mxu0 0.0
        %907 = vmatprep.subr.mxu0 0.0
        %908 = vmatpush2.xpose.msra.mxu0 0.0
        %909 = vmatprep.subr.mxu0 0.0
        %910 = vmatpush2.xpose.msra.mxu0 0.0
        %911 = vmatprep.subr.mxu0 0.0
        %912 = vmatpush2.xpose.msra.mxu0 0.0
        %913 = vmatprep.subr.mxu0 0.0
        %914 = vmatpush2.xpose.msra.mxu0 0.0
        %915 = vmatprep.subr.mxu0 0.0
        %916 = vmatpush2.xpose.msra.mxu0 0.0
        %917 = vmatprep.subr.mxu0 0.0
        %918 = vmatpush2.xpose.msra.mxu0 0.0
        %919 = vmatprep.subr.mxu0 0.0
        %920 = vmatpush2.xpose.msra.mxu0 0.0
        %921 = vmatprep.subr.mxu0 0.0
        %922 = vmatpush2.xpose.msra.mxu0 0.0
        %923 = vmatprep.subr.mxu0 0.0
        %924 = vmatpush2.xpose.msra.mxu0 0.0
        %925 = vmatprep.subr.mxu0 0.0
        %926 = vmatpush2.xpose.msra.mxu0 0.0
        %927 = vmatprep.subr.mxu0 0.0
        %928 = vmatpush2.xpose.msra.mxu0 0.0
        %929 = vmatprep.subr.mxu0 0.0
        %930 = vmatpush2.xpose.msra.mxu0 0.0
        %931 = vmatprep.subr.mxu0 0.0
        %932 = vmatpush2.xpose.msra.mxu0 0.0
        %933 = vmatprep.subr.mxu0 0.0
        %934 = vmatpush2.xpose.msra.mxu0 0.0
        %935 = vmatprep.mubr.f32.mxu0 0.0
        %v936 = vand.u32 %v414, 4294901760
        %v937 = vsub.f32 %v414, %v936
        %938 = vmatmul.mubr.f32.gmra.mxu0 %v937
        %v939 = vpop.f32.mrf.mxu0
        %v940 = vadd.f32 %v794, %v939
        %v941 = vpop.f32.mrf.mxu0
        %942 = vmatprep.mubr.f32.mxu0 0.0
        %v943 = vand.u32 %v417, 4294901760
        %v944 = vsub.f32 %v417, %v943
        %945 = vmatmul.mubr.f32.gmra.mxu0 %v944
        %v946 = vpop.f32.mrf.mxu0
        %v947 = vadd.f32 %v800, %v946
        %v948 = vpop.f32.mrf.mxu0
        %949 = vmatprep.mubr.f32.mxu0 0.0
        %v950 = vand.u32 %v420, 4294901760
        %v951 = vsub.f32 %v420, %v950
        %952 = vmatmul.mubr.f32.gmra.mxu0 %v951
        %v953 = vpop.f32.mrf.mxu0
        %v954 = vadd.f32 %v806, %v953
        %v955 = vpop.f32.mrf.mxu0
        %956 = vmatprep.mubr.f32.mxu0 0.0
        %v957 = vand.u32 %v423, 4294901760
        %v958 = vsub.f32 %v423, %v957
        %959 = vmatmul.mubr.f32.gmra.mxu0 %v958
        %v960 = vpop.f32.mrf.mxu0
        %v961 = vadd.f32 %v812, %v960
        %v962 = vpop.f32.mrf.mxu0
        %963 = vmatprep.mubr.f32.mxu0 0.0
        %v964 = vand.u32 %v426, 4294901760
        %v965 = vsub.f32 %v426, %v964
        %966 = vmatmul.mubr.f32.gmra.mxu0 %v965
        %v967 = vpop.f32.mrf.mxu0
        %v968 = vadd.f32 %v818, %v967
        %v969 = vpop.f32.mrf.mxu0
        %970 = vmatprep.mubr.f32.mxu0 0.0
        %v971 = vand.u32 %v429, 4294901760
        %v972 = vsub.f32 %v429, %v971
        %973 = vmatmul.mubr.f32.gmra.mxu0 %v972
        %v974 = vpop.f32.mrf.mxu0
        %v975 = vadd.f32 %v824, %v974
        %v976 = vpop.f32.mrf.mxu0
        %977 = vmatprep.mubr.f32.mxu0 0.0
        %v978 = vand.u32 %v432, 4294901760
        %v979 = vsub.f32 %v432, %v978
        %980 = vmatmul.mubr.f32.gmra.mxu0 %v979
        %v981 = vpop.f32.mrf.mxu0
        %v982 = vadd.f32 %v830, %v981
        %v983 = vpop.f32.mrf.mxu0
        %984 = vmatprep.mubr.f32.mxu0 0.0
        %v985 = vand.u32 %v435, 4294901760
        %v986 = vsub.f32 %v435, %v985
        %987 = vmatmul.mubr.f32.gmra.mxu0 %v986
        %v988 = vpop.f32.mrf.mxu0
        %v989 = vadd.f32 %v836, %v988
        %v990 = vpop.f32.mrf.mxu0
        %991 = vdwg.mxu0
        %992 = vmatprep.subr.mxu0 0.0
        %v993 = vand.u32 %v483, 4294901760
        %994 = vmatpush1.xpose.msra.mxu0 %v993
        %995 = vmatprep.subr.mxu0 0.0
        %v996 = vand.u32 %v480, 4294901760
        %997 = vmatpush1.xpose.msra.mxu0 %v996
        %998 = vmatprep.subr.mxu0 0.0
        %v999 = vand.u32 %v477, 4294901760
        %1000 = vmatpush1.xpose.msra.mxu0 %v999
        %1001 = vmatprep.subr.mxu0 0.0
        %v1002 = vand.u32 %v474, 4294901760
        %1003 = vmatpush1.xpose.msra.mxu0 %v1002
        %1004 = vmatprep.subr.mxu0 0.0
        %v1005 = vand.u32 %v471, 4294901760
        %1006 = vmatpush1.xpose.msra.mxu0 %v1005
        %1007 = vmatprep.subr.mxu0 0.0
        %v1008 = vand.u32 %v468, 4294901760
        %1009 = vmatpush1.xpose.msra.mxu0 %v1008
        %1010 = vmatprep.subr.mxu0 0.0
        %v1011 = vand.u32 %v465, 4294901760
        %1012 = vmatpush1.xpose.msra.mxu0 %v1011
        %1013 = vmatprep.subr.mxu0 0.0
        %v1014 = vand.u32 %v462, 4294901760
        %1015 = vmatpush1.xpose.msra.mxu0 %v1014
        %1016 = vmatprep.subr.mxu0 0.0
        %v1017 = vand.u32 %v459, 4294901760
        %1018 = vmatpush1.xpose.msra.mxu0 %v1017
        %1019 = vmatprep.subr.mxu0 0.0
        %v1020 = vand.u32 %v456, 4294901760
        %1021 = vmatpush1.xpose.msra.mxu0 %v1020
        %1022 = vmatprep.subr.mxu0 0.0
        %v1023 = vand.u32 %v453, 4294901760
        %1024 = vmatpush1.xpose.msra.mxu0 %v1023
        %1025 = vmatprep.subr.mxu0 0.0
        %v1026 = vand.u32 %v450, 4294901760
        %1027 = vmatpush1.xpose.msra.mxu0 %v1026
        %1028 = vmatprep.subr.mxu0 0.0
        %v1029 = vand.u32 %v447, 4294901760
        %1030 = vmatpush1.xpose.msra.mxu0 %v1029
        %1031 = vmatprep.subr.mxu0 0.0
        %v1032 = vand.u32 %v444, 4294901760
        %1033 = vmatpush1.xpose.msra.mxu0 %v1032
        %1034 = vmatprep.subr.mxu0 0.0
        %v1035 = vand.u32 %v441, 4294901760
        %1036 = vmatpush1.xpose.msra.mxu0 %v1035
        %1037 = vmatprep.subr.mxu0 0.0
        %v1038 = vand.u32 %v438, 4294901760
        %1039 = vmatpush1.xpose.msra.mxu0 %v1038
        %1040 = vmatprep.subr.mxu0 0.0
        %1041 = vmatpush2.xpose.msra.mxu0 0.0
        %1042 = vmatprep.subr.mxu0 0.0
        %1043 = vmatpush2.xpose.msra.mxu0 0.0
        %1044 = vmatprep.subr.mxu0 0.0
        %1045 = vmatpush2.xpose.msra.mxu0 0.0
        %1046 = vmatprep.subr.mxu0 0.0
        %1047 = vmatpush2.xpose.msra.mxu0 0.0
        %1048 = vmatprep.subr.mxu0 0.0
        %1049 = vmatpush2.xpose.msra.mxu0 0.0
        %1050 = vmatprep.subr.mxu0 0.0
        %1051 = vmatpush2.xpose.msra.mxu0 0.0
        %1052 = vmatprep.subr.mxu0 0.0
        %1053 = vmatpush2.xpose.msra.mxu0 0.0
        %1054 = vmatprep.subr.mxu0 0.0
        %1055 = vmatpush2.xpose.msra.mxu0 0.0
        %1056 = vmatprep.subr.mxu0 0.0
        %1057 = vmatpush2.xpose.msra.mxu0 0.0
        %1058 = vmatprep.subr.mxu0 0.0
        %1059 = vmatpush2.xpose.msra.mxu0 0.0
        %1060 = vmatprep.subr.mxu0 0.0
        %1061 = vmatpush2.xpose.msra.mxu0 0.0
        %1062 = vmatprep.subr.mxu0 0.0
        %1063 = vmatpush2.xpose.msra.mxu0 0.0
        %1064 = vmatprep.subr.mxu0 0.0
        %1065 = vmatpush2.xpose.msra.mxu0 0.0
        %1066 = vmatprep.subr.mxu0 0.0
        %1067 = vmatpush2.xpose.msra.mxu0 0.0
        %1068 = vmatprep.subr.mxu0 0.0
        %1069 = vmatpush2.xpose.msra.mxu0 0.0
        %1070 = vmatprep.subr.mxu0 0.0
        %1071 = vmatpush2.xpose.msra.mxu0 0.0
        %1072 = vmatprep.mubr.f32.mxu0 0.0
        %v1073 = vand.u32 %v414, 4294901760
        %v1074 = vsub.f32 %v414, %v1073
        %v1075 = vand.u32 %v1074, 4294901760
        %1076 = vmatmul.mubr.f32.gmra.mxu0 %v1075
        %v1077 = vpop.f32.mrf.mxu0
        %v1078 = vadd.f32 %v940, %v1077
        %v1079 = vpop.f32.mrf.mxu0
        %1080 = vmatprep.mubr.f32.mxu0 0.0
        %v1081 = vand.u32 %v417, 4294901760
        %v1082 = vsub.f32 %v417, %v1081
        %v1083 = vand.u32 %v1082, 4294901760
        %1084 = vmatmul.mubr.f32.gmra.mxu0 %v1083
        %v1085 = vpop.f32.mrf.mxu0
        %v1086 = vadd.f32 %v947, %v1085
        %v1087 = vpop.f32.mrf.mxu0
        %1088 = vmatprep.mubr.f32.mxu0 0.0
        %v1089 = vand.u32 %v420, 4294901760
        %v1090 = vsub.f32 %v420, %v1089
        %v1091 = vand.u32 %v1090, 4294901760
        %1092 = vmatmul.mubr.f32.gmra.mxu0 %v1091
        %v1093 = vpop.f32.mrf.mxu0
        %v1094 = vadd.f32 %v954, %v1093
        %v1095 = vpop.f32.mrf.mxu0
        %1096 = vmatprep.mubr.f32.mxu0 0.0
        %v1097 = vand.u32 %v423, 4294901760
        %v1098 = vsub.f32 %v423, %v1097
        %v1099 = vand.u32 %v1098, 4294901760
        %1100 = vmatmul.mubr.f32.gmra.mxu0 %v1099
        %v1101 = vpop.f32.mrf.mxu0
        %v1102 = vadd.f32 %v961, %v1101
        %v1103 = vpop.f32.mrf.mxu0
        %1104 = vmatprep.mubr.f32.mxu0 0.0
        %v1105 = vand.u32 %v426, 4294901760
        %v1106 = vsub.f32 %v426, %v1105
        %v1107 = vand.u32 %v1106, 4294901760
        %1108 = vmatmul.mubr.f32.gmra.mxu0 %v1107
        %v1109 = vpop.f32.mrf.mxu0
        %v1110 = vadd.f32 %v968, %v1109
        %v1111 = vpop.f32.mrf.mxu0
        %1112 = vmatprep.mubr.f32.mxu0 0.0
        %v1113 = vand.u32 %v429, 4294901760
        %v1114 = vsub.f32 %v429, %v1113
        %v1115 = vand.u32 %v1114, 4294901760
        %1116 = vmatmul.mubr.f32.gmra.mxu0 %v1115
        %v1117 = vpop.f32.mrf.mxu0
        %v1118 = vadd.f32 %v975, %v1117
        %v1119 = vpop.f32.mrf.mxu0
        %1120 = vmatprep.mubr.f32.mxu0 0.0
        %v1121 = vand.u32 %v432, 4294901760
        %v1122 = vsub.f32 %v432, %v1121
        %v1123 = vand.u32 %v1122, 4294901760
        %1124 = vmatmul.mubr.f32.gmra.mxu0 %v1123
        %v1125 = vpop.f32.mrf.mxu0
        %v1126 = vadd.f32 %v982, %v1125
        %v1127 = vpop.f32.mrf.mxu0
        %1128 = vmatprep.mubr.f32.mxu0 0.0
        %v1129 = vand.u32 %v435, 4294901760
        %v1130 = vsub.f32 %v435, %v1129
        %v1131 = vand.u32 %v1130, 4294901760
        %1132 = vmatmul.mubr.f32.gmra.mxu0 %v1131
        %v1133 = vpop.f32.mrf.mxu0
        %v1134 = vadd.f32 %v989, %v1133
        %v1135 = vpop.f32.mrf.mxu0
        %1136 = vdwg.mxu0
        %1137 = vmatprep.subr.mxu0 0.0
        %v1138 = vand.u32 %v483, 4294901760
        %v1139 = vsub.f32 %v483, %v1138
        %v1140 = vand.u32 %v1139, 4294901760
        %1141 = vmatpush1.xpose.msra.mxu0 %v1140
        %1142 = vmatprep.subr.mxu0 0.0
        %v1143 = vand.u32 %v480, 4294901760
        %v1144 = vsub.f32 %v480, %v1143
        %v1145 = vand.u32 %v1144, 4294901760
        %1146 = vmatpush1.xpose.msra.mxu0 %v1145
        %1147 = vmatprep.subr.mxu0 0.0
        %v1148 = vand.u32 %v477, 4294901760
        %v1149 = vsub.f32 %v477, %v1148
        %v1150 = vand.u32 %v1149, 4294901760
        %1151 = vmatpush1.xpose.msra.mxu0 %v1150
        %1152 = vmatprep.subr.mxu0 0.0
        %v1153 = vand.u32 %v474, 4294901760
        %v1154 = vsub.f32 %v474, %v1153
        %v1155 = vand.u32 %v1154, 4294901760
        %1156 = vmatpush1.xpose.msra.mxu0 %v1155
        %1157 = vmatprep.subr.mxu0 0.0
        %v1158 = vand.u32 %v471, 4294901760
        %v1159 = vsub.f32 %v471, %v1158
        %v1160 = vand.u32 %v1159, 4294901760
        %1161 = vmatpush1.xpose.msra.mxu0 %v1160
        %1162 = vmatprep.subr.mxu0 0.0
        %v1163 = vand.u32 %v468, 4294901760
        %v1164 = vsub.f32 %v468, %v1163
        %v1165 = vand.u32 %v1164, 4294901760
        %1166 = vmatpush1.xpose.msra.mxu0 %v1165
        %1167 = vmatprep.subr.mxu0 0.0
        %v1168 = vand.u32 %v465, 4294901760
        %v1169 = vsub.f32 %v465, %v1168
        %v1170 = vand.u32 %v1169, 4294901760
        %1171 = vmatpush1.xpose.msra.mxu0 %v1170
        %1172 = vmatprep.subr.mxu0 0.0
        %v1173 = vand.u32 %v462, 4294901760
        %v1174 = vsub.f32 %v462, %v1173
        %v1175 = vand.u32 %v1174, 4294901760
        %1176 = vmatpush1.xpose.msra.mxu0 %v1175
        %1177 = vmatprep.subr.mxu0 0.0
        %v1178 = vand.u32 %v459, 4294901760
        %v1179 = vsub.f32 %v459, %v1178
        %v1180 = vand.u32 %v1179, 4294901760
        %1181 = vmatpush1.xpose.msra.mxu0 %v1180
        %1182 = vmatprep.subr.mxu0 0.0
        %v1183 = vand.u32 %v456, 4294901760
        %v1184 = vsub.f32 %v456, %v1183
        %v1185 = vand.u32 %v1184, 4294901760
        %1186 = vmatpush1.xpose.msra.mxu0 %v1185
        %1187 = vmatprep.subr.mxu0 0.0
        %v1188 = vand.u32 %v453, 4294901760
        %v1189 = vsub.f32 %v453, %v1188
        %v1190 = vand.u32 %v1189, 4294901760
        %1191 = vmatpush1.xpose.msra.mxu0 %v1190
        %1192 = vmatprep.subr.mxu0 0.0
        %v1193 = vand.u32 %v450, 4294901760
        %v1194 = vsub.f32 %v450, %v1193
        %v1195 = vand.u32 %v1194, 4294901760
        %1196 = vmatpush1.xpose.msra.mxu0 %v1195
        %1197 = vmatprep.subr.mxu0 0.0
        %v1198 = vand.u32 %v447, 4294901760
        %v1199 = vsub.f32 %v447, %v1198
        %v1200 = vand.u32 %v1199, 4294901760
        %1201 = vmatpush1.xpose.msra.mxu0 %v1200
        %1202 = vmatprep.subr.mxu0 0.0
        %v1203 = vand.u32 %v444, 4294901760
        %v1204 = vsub.f32 %v444, %v1203
        %v1205 = vand.u32 %v1204, 4294901760
        %1206 = vmatpush1.xpose.msra.mxu0 %v1205
        %1207 = vmatprep.subr.mxu0 0.0
        %v1208 = vand.u32 %v441, 4294901760
        %v1209 = vsub.f32 %v441, %v1208
        %v1210 = vand.u32 %v1209, 4294901760
        %1211 = vmatpush1.xpose.msra.mxu0 %v1210
        %1212 = vmatprep.subr.mxu0 0.0
        %v1213 = vand.u32 %v438, 4294901760
        %v1214 = vsub.f32 %v438, %v1213
        %v1215 = vand.u32 %v1214, 4294901760
        %1216 = vmatpush1.xpose.msra.mxu0 %v1215
        %1217 = vmatprep.subr.mxu0 0.0
        %1218 = vmatpush2.xpose.msra.mxu0 0.0
        %1219 = vmatprep.subr.mxu0 0.0
        %1220 = vmatpush2.xpose.msra.mxu0 0.0
        %1221 = vmatprep.subr.mxu0 0.0
        %1222 = vmatpush2.xpose.msra.mxu0 0.0
        %1223 = vmatprep.subr.mxu0 0.0
        %1224 = vmatpush2.xpose.msra.mxu0 0.0
        %1225 = vmatprep.subr.mxu0 0.0
        %1226 = vmatpush2.xpose.msra.mxu0 0.0
        %1227 = vmatprep.subr.mxu0 0.0
        %1228 = vmatpush2.xpose.msra.mxu0 0.0
        %1229 = vmatprep.subr.mxu0 0.0
        %1230 = vmatpush2.xpose.msra.mxu0 0.0
        %1231 = vmatprep.subr.mxu0 0.0
        %1232 = vmatpush2.xpose.msra.mxu0 0.0
        %1233 = vmatprep.subr.mxu0 0.0
        %1234 = vmatpush2.xpose.msra.mxu0 0.0
        %1235 = vmatprep.subr.mxu0 0.0
        %1236 = vmatpush2.xpose.msra.mxu0 0.0
        %1237 = vmatprep.subr.mxu0 0.0
        %1238 = vmatpush2.xpose.msra.mxu0 0.0
        %1239 = vmatprep.subr.mxu0 0.0
        %1240 = vmatpush2.xpose.msra.mxu0 0.0
        %1241 = vmatprep.subr.mxu0 0.0
        %1242 = vmatpush2.xpose.msra.mxu0 0.0
        %1243 = vmatprep.subr.mxu0 0.0
        %1244 = vmatpush2.xpose.msra.mxu0 0.0
        %1245 = vmatprep.subr.mxu0 0.0
        %1246 = vmatpush2.xpose.msra.mxu0 0.0
        %1247 = vmatprep.subr.mxu0 0.0
        %1248 = vmatpush2.xpose.msra.mxu0 0.0
        %1249 = vmatprep.mubr.f32.mxu0 0.0
        %v1250 = vand.u32 %v414, 4294901760
        %1251 = vmatmul.mubr.f32.gmra.mxu0 %v1250
        %v1252 = vpop.f32.mrf.mxu0
        %v1253 = vadd.f32 %v1078, %v1252
        %v1254 = vpop.f32.mrf.mxu0
        %1255 = vmatprep.mubr.f32.mxu0 0.0
        %v1256 = vand.u32 %v417, 4294901760
        %1257 = vmatmul.mubr.f32.gmra.mxu0 %v1256
        %v1258 = vpop.f32.mrf.mxu0
        %v1259 = vadd.f32 %v1086, %v1258
        %v1260 = vpop.f32.mrf.mxu0
        %1261 = vmatprep.mubr.f32.mxu0 0.0
        %v1262 = vand.u32 %v420, 4294901760
        %1263 = vmatmul.mubr.f32.gmra.mxu0 %v1262
        %v1264 = vpop.f32.mrf.mxu0
        %v1265 = vadd.f32 %v1094, %v1264
        %v1266 = vpop.f32.mrf.mxu0
        %1267 = vmatprep.mubr.f32.mxu0 0.0
        %v1268 = vand.u32 %v423, 4294901760
        %1269 = vmatmul.mubr.f32.gmra.mxu0 %v1268
        %v1270 = vpop.f32.mrf.mxu0
        %v1271 = vadd.f32 %v1102, %v1270
        %v1272 = vpop.f32.mrf.mxu0
        %1273 = vmatprep.mubr.f32.mxu0 0.0
        %v1274 = vand.u32 %v426, 4294901760
        %1275 = vmatmul.mubr.f32.gmra.mxu0 %v1274
        %v1276 = vpop.f32.mrf.mxu0
        %v1277 = vadd.f32 %v1110, %v1276
        %v1278 = vpop.f32.mrf.mxu0
        %1279 = vmatprep.mubr.f32.mxu0 0.0
        %v1280 = vand.u32 %v429, 4294901760
        %1281 = vmatmul.mubr.f32.gmra.mxu0 %v1280
        %v1282 = vpop.f32.mrf.mxu0
        %v1283 = vadd.f32 %v1118, %v1282
        %v1284 = vpop.f32.mrf.mxu0
        %1285 = vmatprep.mubr.f32.mxu0 0.0
        %v1286 = vand.u32 %v432, 4294901760
        %1287 = vmatmul.mubr.f32.gmra.mxu0 %v1286
        %v1288 = vpop.f32.mrf.mxu0
        %v1289 = vadd.f32 %v1126, %v1288
        %v1290 = vpop.f32.mrf.mxu0
        %1291 = vmatprep.mubr.f32.mxu0 0.0
        %v1292 = vand.u32 %v435, 4294901760
        %1293 = vmatmul.mubr.f32.gmra.mxu0 %v1292
        %v1294 = vpop.f32.mrf.mxu0
        %v1295 = vadd.f32 %v1134, %v1294
        %v1296 = vpop.f32.mrf.mxu0
        %1297 = vdwg.mxu0
        %1298 = vmatprep.subr.mxu0 0.0
        %v1299 = vand.u32 %v483, 4294901760
        %1300 = vmatpush1.xpose.msra.mxu0 %v1299
        %1301 = vmatprep.subr.mxu0 0.0
        %v1302 = vand.u32 %v480, 4294901760
        %1303 = vmatpush1.xpose.msra.mxu0 %v1302
        %1304 = vmatprep.subr.mxu0 0.0
        %v1305 = vand.u32 %v477, 4294901760
        %1306 = vmatpush1.xpose.msra.mxu0 %v1305
        %1307 = vmatprep.subr.mxu0 0.0
        %v1308 = vand.u32 %v474, 4294901760
        %1309 = vmatpush1.xpose.msra.mxu0 %v1308
        %1310 = vmatprep.subr.mxu0 0.0
        %v1311 = vand.u32 %v471, 4294901760
        %1312 = vmatpush1.xpose.msra.mxu0 %v1311
        %1313 = vmatprep.subr.mxu0 0.0
        %v1314 = vand.u32 %v468, 4294901760
        %1315 = vmatpush1.xpose.msra.mxu0 %v1314
        %1316 = vmatprep.subr.mxu0 0.0
        %v1317 = vand.u32 %v465, 4294901760
        %1318 = vmatpush1.xpose.msra.mxu0 %v1317
        %1319 = vmatprep.subr.mxu0 0.0
        %v1320 = vand.u32 %v462, 4294901760
        %1321 = vmatpush1.xpose.msra.mxu0 %v1320
        %1322 = vmatprep.subr.mxu0 0.0
        %v1323 = vand.u32 %v459, 4294901760
        %1324 = vmatpush1.xpose.msra.mxu0 %v1323
        %1325 = vmatprep.subr.mxu0 0.0
        %v1326 = vand.u32 %v456, 4294901760
        %1327 = vmatpush1.xpose.msra.mxu0 %v1326
        %1328 = vmatprep.subr.mxu0 0.0
        %v1329 = vand.u32 %v453, 4294901760
        %1330 = vmatpush1.xpose.msra.mxu0 %v1329
        %1331 = vmatprep.subr.mxu0 0.0
        %v1332 = vand.u32 %v450, 4294901760
        %1333 = vmatpush1.xpose.msra.mxu0 %v1332
        %1334 = vmatprep.subr.mxu0 0.0
        %v1335 = vand.u32 %v447, 4294901760
        %1336 = vmatpush1.xpose.msra.mxu0 %v1335
        %1337 = vmatprep.subr.mxu0 0.0
        %v1338 = vand.u32 %v444, 4294901760
        %1339 = vmatpush1.xpose.msra.mxu0 %v1338
        %1340 = vmatprep.subr.mxu0 0.0
        %v1341 = vand.u32 %v441, 4294901760
        %1342 = vmatpush1.xpose.msra.mxu0 %v1341
        %1343 = vmatprep.subr.mxu0 0.0
        %v1344 = vand.u32 %v438, 4294901760
        %1345 = vmatpush1.xpose.msra.mxu0 %v1344
        %1346 = vmatprep.subr.mxu0 0.0
        %1347 = vmatpush2.xpose.msra.mxu0 0.0
        %1348 = vmatprep.subr.mxu0 0.0
        %1349 = vmatpush2.xpose.msra.mxu0 0.0
        %1350 = vmatprep.subr.mxu0 0.0
        %1351 = vmatpush2.xpose.msra.mxu0 0.0
        %1352 = vmatprep.subr.mxu0 0.0
        %1353 = vmatpush2.xpose.msra.mxu0 0.0
        %1354 = vmatprep.subr.mxu0 0.0
        %1355 = vmatpush2.xpose.msra.mxu0 0.0
        %1356 = vmatprep.subr.mxu0 0.0
        %1357 = vmatpush2.xpose.msra.mxu0 0.0
        %1358 = vmatprep.subr.mxu0 0.0
        %1359 = vmatpush2.xpose.msra.mxu0 0.0
        %1360 = vmatprep.subr.mxu0 0.0
        %1361 = vmatpush2.xpose.msra.mxu0 0.0
        %1362 = vmatprep.subr.mxu0 0.0
        %1363 = vmatpush2.xpose.msra.mxu0 0.0
        %1364 = vmatprep.subr.mxu0 0.0
        %1365 = vmatpush2.xpose.msra.mxu0 0.0
        %1366 = vmatprep.subr.mxu0 0.0
        %1367 = vmatpush2.xpose.msra.mxu0 0.0
        %1368 = vmatprep.subr.mxu0 0.0
        %1369 = vmatpush2.xpose.msra.mxu0 0.0
        %1370 = vmatprep.subr.mxu0 0.0
        %1371 = vmatpush2.xpose.msra.mxu0 0.0
        %1372 = vmatprep.subr.mxu0 0.0
        %1373 = vmatpush2.xpose.msra.mxu0 0.0
        %1374 = vmatprep.subr.mxu0 0.0
        %1375 = vmatpush2.xpose.msra.mxu0 0.0
        %1376 = vmatprep.subr.mxu0 0.0
        %1377 = vmatpush2.xpose.msra.mxu0 0.0
        %1378 = vmatprep.mubr.f32.mxu0 0.0
        %v1379 = vand.u32 %v414, 4294901760
        %1380 = vmatmul.mubr.f32.gmra.mxu0 %v1379
        %v1381 = vpop.f32.mrf.mxu0
        %v1382 = vadd.f32 %v1253, %v1381
        %v1383 = vpop.f32.mrf.mxu0
        %1384 = vmatprep.mubr.f32.mxu0 0.0
        %v1385 = vand.u32 %v417, 4294901760
        %1386 = vmatmul.mubr.f32.gmra.mxu0 %v1385
        %v1387 = vpop.f32.mrf.mxu0
        %v1388 = vadd.f32 %v1259, %v1387
        %v1389 = vpop.f32.mrf.mxu0
        %1390 = vmatprep.mubr.f32.mxu0 0.0
        %v1391 = vand.u32 %v420, 4294901760
        %1392 = vmatmul.mubr.f32.gmra.mxu0 %v1391
        %v1393 = vpop.f32.mrf.mxu0
        %v1394 = vadd.f32 %v1265, %v1393
        %v1395 = vpop.f32.mrf.mxu0
        %1396 = vmatprep.mubr.f32.mxu0 0.0
        %v1397 = vand.u32 %v423, 4294901760
        %1398 = vmatmul.mubr.f32.gmra.mxu0 %v1397
        %v1399 = vpop.f32.mrf.mxu0
        %v1400 = vadd.f32 %v1271, %v1399
        %v1401 = vpop.f32.mrf.mxu0
        %1402 = vmatprep.mubr.f32.mxu0 0.0
        %v1403 = vand.u32 %v426, 4294901760
        %1404 = vmatmul.mubr.f32.gmra.mxu0 %v1403
        %v1405 = vpop.f32.mrf.mxu0
        %v1406 = vadd.f32 %v1277, %v1405
        %v1407 = vpop.f32.mrf.mxu0
        %1408 = vmatprep.mubr.f32.mxu0 0.0
        %v1409 = vand.u32 %v429, 4294901760
        %1410 = vmatmul.mubr.f32.gmra.mxu0 %v1409
        %v1411 = vpop.f32.mrf.mxu0
        %v1412 = vadd.f32 %v1283, %v1411
        %v1413 = vpop.f32.mrf.mxu0
        %1414 = vmatprep.mubr.f32.mxu0 0.0
        %v1415 = vand.u32 %v432, 4294901760
        %1416 = vmatmul.mubr.f32.gmra.mxu0 %v1415
        %v1417 = vpop.f32.mrf.mxu0
        %v1418 = vadd.f32 %v1289, %v1417
        %v1419 = vpop.f32.mrf.mxu0
        %1420 = vmatprep.mubr.f32.mxu0 0.0
        %v1421 = vand.u32 %v435, 4294901760
        %1422 = vmatmul.mubr.f32.gmra.mxu0 %v1421
        %v1423 = vpop.f32.mrf.mxu0
        %v1424 = vadd.f32 %v1295, %v1423
        %v1425 = vpop.f32.mrf.mxu0
        %1426 = vdwg.mxu0
        %v1427 = vmax.f32 %v1382, 0.0
        %v1428 = vmax.f32 %v1388, 0.0
        %v1429 = vmax.f32 %v1394, 0.0
        %v1430 = vmax.f32 %v1400, 0.0
        %v1431 = vmax.f32 %v1406, 0.0
        %v1432 = vmax.f32 %v1412, 0.0
        %v1433 = vmax.f32 %v1418, 0.0
        %v1434 = vmax.f32 %v1424, 0.0
        %v1435 = vld [vmem:[%s4] sm:$0xff]
        %v1436 = vld [vmem:[%s4 + $0x8] sm:$0xff]
        %v1437 = vld [vmem:[%s4 + $0x10] sm:$0xff]
        %v1438 = vld [vmem:[%s4 + $0x18] sm:$0xff]
        %v1439 = vld [vmem:[%s5] sm:$0xff]
        %v1440 = vld [vmem:[%s5 + $0x8] sm:$0xff]
        %v1441 = vld [vmem:[%s5 + $0x10] sm:$0xff]
        %v1442 = vld [vmem:[%s5 + $0x18] sm:$0xff]
        %1444 = vset.pattern.permute.xlu0 0
        %1445 = vperm.xlu0 %1444, %v1439
        %v1446 = vpop.permute.xlu0 %1445
        %1449 = vset.pattern.permute.xlu0 0
        %1450 = vperm.xlu0 %1449, %v1440
        %v1451 = vpop.permute.xlu0 %1450
        %1454 = vset.pattern.permute.xlu0 0
        %1455 = vperm.xlu0 %1454, %v1441
        %v1456 = vpop.permute.xlu0 %1455
        %1459 = vset.pattern.permute.xlu0 0
        %1460 = vperm.xlu0 %1459, %v1442
        %v1461 = vpop.permute.xlu0 %1460
        %vm1463 = vcmask 523264
        %v1465 = vsel %vm1463, %v1435, 0
        %v1468 = vsel %vm1463, %v1436, 0
        %v1471 = vsel %vm1463, %v1437, 0
        %v1474 = vsel %vm1463, %v1438, 0
        %1476 = vmatprep.subr.mxu0 0.0
        %1477 = vmatpush1.msra.mxu0 0.0
        %1478 = vmatprep.subr.mxu0 0.0
        %1479 = vmatpush1.msra.mxu0 0.0
        %1480 = vmatprep.subr.mxu0 0.0
        %1481 = vmatpush1.msra.mxu0 0.0
        %1482 = vmatprep.subr.mxu0 0.0
        %1483 = vmatpush1.msra.mxu0 0.0
        %1484 = vmatprep.subr.mxu0 0.0
        %1485 = vmatpush1.msra.mxu0 0.0
        %1486 = vmatprep.subr.mxu0 0.0
        %1487 = vmatpush1.msra.mxu0 0.0
        %1488 = vmatprep.subr.mxu0 0.0
        %1489 = vmatpush1.msra.mxu0 0.0
        %1490 = vmatprep.subr.mxu0 0.0
        %1491 = vmatpush1.msra.mxu0 0.0
        %1492 = vmatprep.subr.mxu0 0.0
        %v1493 = vand.u32 %v1434, 4294901760
        %1494 = vmatpush1.msra.mxu0 %v1493
        %1495 = vmatprep.subr.mxu0 0.0
        %v1496 = vand.u32 %v1433, 4294901760
        %1497 = vmatpush1.msra.mxu0 %v1496
        %1498 = vmatprep.subr.mxu0 0.0
        %v1499 = vand.u32 %v1432, 4294901760
        %1500 = vmatpush1.msra.mxu0 %v1499
        %1501 = vmatprep.subr.mxu0 0.0
        %v1502 = vand.u32 %v1431, 4294901760
        %1503 = vmatpush1.msra.mxu0 %v1502
        %1504 = vmatprep.subr.mxu0 0.0
        %v1505 = vand.u32 %v1430, 4294901760
        %1506 = vmatpush1.msra.mxu0 %v1505
        %1507 = vmatprep.subr.mxu0 0.0
        %v1508 = vand.u32 %v1429, 4294901760
        %1509 = vmatpush1.msra.mxu0 %v1508
        %1510 = vmatprep.subr.mxu0 0.0
        %v1511 = vand.u32 %v1428, 4294901760
        %1512 = vmatpush1.msra.mxu0 %v1511
        %1513 = vmatprep.subr.mxu0 0.0
        %v1514 = vand.u32 %v1427, 4294901760
        %1515 = vmatpush1.msra.mxu0 %v1514
        %1516 = vmatprep.subr.mxu0 0.0
        %1517 = vmatpush2.msra.mxu0 0.0
        %1518 = vmatprep.subr.mxu0 0.0
        %1519 = vmatpush2.msra.mxu0 0.0
        %1520 = vmatprep.subr.mxu0 0.0
        %1521 = vmatpush2.msra.mxu0 0.0
        %1522 = vmatprep.subr.mxu0 0.0
        %1523 = vmatpush2.msra.mxu0 0.0
        %1524 = vmatprep.subr.mxu0 0.0
        %1525 = vmatpush2.msra.mxu0 0.0
        %1526 = vmatprep.subr.mxu0 0.0
        %1527 = vmatpush2.msra.mxu0 0.0
        %1528 = vmatprep.subr.mxu0 0.0
        %1529 = vmatpush2.msra.mxu0 0.0
        %1530 = vmatprep.subr.mxu0 0.0
        %1531 = vmatpush2.msra.mxu0 0.0
        %1532 = vmatprep.subr.mxu0 0.0
        %1533 = vmatpush2.msra.mxu0 0.0
        %1534 = vmatprep.subr.mxu0 0.0
        %1535 = vmatpush2.msra.mxu0 0.0
        %1536 = vmatprep.subr.mxu0 0.0
        %1537 = vmatpush2.msra.mxu0 0.0
        %1538 = vmatprep.subr.mxu0 0.0
        %1539 = vmatpush2.msra.mxu0 0.0
        %1540 = vmatprep.subr.mxu0 0.0
        %1541 = vmatpush2.msra.mxu0 0.0
        %1542 = vmatprep.subr.mxu0 0.0
        %1543 = vmatpush2.msra.mxu0 0.0
        %1544 = vmatprep.subr.mxu0 0.0
        %1545 = vmatpush2.msra.mxu0 0.0
        %1546 = vmatprep.subr.mxu0 0.0
        %1547 = vmatpush2.msra.mxu0 0.0
        %1548 = vmatprep.mubr.f32.mxu0 0.0
        %v1549 = vand.u32 %v1465, 4294901760
        %v1550 = vsub.f32 %v1465, %v1549
        %v1551 = vand.u32 %v1550, 4294901760
        %v1552 = vsub.f32 %v1550, %v1551
        %v1553 = vand.u32 %v1552, 4294901760
        %1554 = vmatmul.mubr.f32.gmra.mxu0 %v1553
        %v1555 = vpop.f32.mrf.mxu0
        %v1556 = vadd.f32 %v1446, %v1555
        %v1557 = vpop.f32.mrf.mxu0
        %1558 = vmatprep.mubr.f32.mxu0 0.0
        %v1559 = vand.u32 %v1468, 4294901760
        %v1560 = vsub.f32 %v1468, %v1559
        %v1561 = vand.u32 %v1560, 4294901760
        %v1562 = vsub.f32 %v1560, %v1561
        %v1563 = vand.u32 %v1562, 4294901760
        %1564 = vmatmul.mubr.f32.gmra.mxu0 %v1563
        %v1565 = vpop.f32.mrf.mxu0
        %v1566 = vadd.f32 %v1451, %v1565
        %v1567 = vpop.f32.mrf.mxu0
        %1568 = vmatprep.mubr.f32.mxu0 0.0
        %v1569 = vand.u32 %v1471, 4294901760
        %v1570 = vsub.f32 %v1471, %v1569
        %v1571 = vand.u32 %v1570, 4294901760
        %v1572 = vsub.f32 %v1570, %v1571
        %v1573 = vand.u32 %v1572, 4294901760
        %1574 = vmatmul.mubr.f32.gmra.mxu0 %v1573
        %v1575 = vpop.f32.mrf.mxu0
        %v1576 = vadd.f32 %v1456, %v1575
        %v1577 = vpop.f32.mrf.mxu0
        %1578 = vmatprep.mubr.f32.mxu0 0.0
        %v1579 = vand.u32 %v1474, 4294901760
        %v1580 = vsub.f32 %v1474, %v1579
        %v1581 = vand.u32 %v1580, 4294901760
        %v1582 = vsub.f32 %v1580, %v1581
        %v1583 = vand.u32 %v1582, 4294901760
        %1584 = vmatmul.mubr.f32.gmra.mxu0 %v1583
        %v1585 = vpop.f32.mrf.mxu0
        %v1586 = vadd.f32 %v1461, %v1585
        %v1587 = vpop.f32.mrf.mxu0
        %1588 = vdwg.mxu0
        %1589 = vmatprep.subr.mxu0 0.0
        %1590 = vmatpush1.msra.mxu0 0.0
        %1591 = vmatprep.subr.mxu0 0.0
        %1592 = vmatpush1.msra.mxu0 0.0
        %1593 = vmatprep.subr.mxu0 0.0
        %1594 = vmatpush1.msra.mxu0 0.0
        %1595 = vmatprep.subr.mxu0 0.0
        %1596 = vmatpush1.msra.mxu0 0.0
        %1597 = vmatprep.subr.mxu0 0.0
        %1598 = vmatpush1.msra.mxu0 0.0
        %1599 = vmatprep.subr.mxu0 0.0
        %1600 = vmatpush1.msra.mxu0 0.0
        %1601 = vmatprep.subr.mxu0 0.0
        %1602 = vmatpush1.msra.mxu0 0.0
        %1603 = vmatprep.subr.mxu0 0.0
        %1604 = vmatpush1.msra.mxu0 0.0
        %1605 = vmatprep.subr.mxu0 0.0
        %v1606 = vand.u32 %v1434, 4294901760
        %v1607 = vsub.f32 %v1434, %v1606
        %v1608 = vand.u32 %v1607, 4294901760
        %v1609 = vsub.f32 %v1607, %v1608
        %v1610 = vand.u32 %v1609, 4294901760
        %1611 = vmatpush1.msra.mxu0 %v1610
        %1612 = vmatprep.subr.mxu0 0.0
        %v1613 = vand.u32 %v1433, 4294901760
        %v1614 = vsub.f32 %v1433, %v1613
        %v1615 = vand.u32 %v1614, 4294901760
        %v1616 = vsub.f32 %v1614, %v1615
        %v1617 = vand.u32 %v1616, 4294901760
        %1618 = vmatpush1.msra.mxu0 %v1617
        %1619 = vmatprep.subr.mxu0 0.0
        %v1620 = vand.u32 %v1432, 4294901760
        %v1621 = vsub.f32 %v1432, %v1620
        %v1622 = vand.u32 %v1621, 4294901760
        %v1623 = vsub.f32 %v1621, %v1622
        %v1624 = vand.u32 %v1623, 4294901760
        %1625 = vmatpush1.msra.mxu0 %v1624
        %1626 = vmatprep.subr.mxu0 0.0
        %v1627 = vand.u32 %v1431, 4294901760
        %v1628 = vsub.f32 %v1431, %v1627
        %v1629 = vand.u32 %v1628, 4294901760
        %v1630 = vsub.f32 %v1628, %v1629
        %v1631 = vand.u32 %v1630, 4294901760
        %1632 = vmatpush1.msra.mxu0 %v1631
        %1633 = vmatprep.subr.mxu0 0.0
        %v1634 = vand.u32 %v1430, 4294901760
        %v1635 = vsub.f32 %v1430, %v1634
        %v1636 = vand.u32 %v1635, 4294901760
        %v1637 = vsub.f32 %v1635, %v1636
        %v1638 = vand.u32 %v1637, 4294901760
        %1639 = vmatpush1.msra.mxu0 %v1638
        %1640 = vmatprep.subr.mxu0 0.0
        %v1641 = vand.u32 %v1429, 4294901760
        %v1642 = vsub.f32 %v1429, %v1641
        %v1643 = vand.u32 %v1642, 4294901760
        %v1644 = vsub.f32 %v1642, %v1643
        %v1645 = vand.u32 %v1644, 4294901760
        %1646 = vmatpush1.msra.mxu0 %v1645
        %1647 = vmatprep.subr.mxu0 0.0
        %v1648 = vand.u32 %v1428, 4294901760
        %v1649 = vsub.f32 %v1428, %v1648
        %v1650 = vand.u32 %v1649, 4294901760
        %v1651 = vsub.f32 %v1649, %v1650
        %v1652 = vand.u32 %v1651, 4294901760
        %1653 = vmatpush1.msra.mxu0 %v1652
        %1654 = vmatprep.subr.mxu0 0.0
        %v1655 = vand.u32 %v1427, 4294901760
        %v1656 = vsub.f32 %v1427, %v1655
        %v1657 = vand.u32 %v1656, 4294901760
        %v1658 = vsub.f32 %v1656, %v1657
        %v1659 = vand.u32 %v1658, 4294901760
        %1660 = vmatpush1.msra.mxu0 %v1659
        %1661 = vmatprep.subr.mxu0 0.0
        %1662 = vmatpush2.msra.mxu0 0.0
        %1663 = vmatprep.subr.mxu0 0.0
        %1664 = vmatpush2.msra.mxu0 0.0
        %1665 = vmatprep.subr.mxu0 0.0
        %1666 = vmatpush2.msra.mxu0 0.0
        %1667 = vmatprep.subr.mxu0 0.0
        %1668 = vmatpush2.msra.mxu0 0.0
        %1669 = vmatprep.subr.mxu0 0.0
        %1670 = vmatpush2.msra.mxu0 0.0
        %1671 = vmatprep.subr.mxu0 0.0
        %1672 = vmatpush2.msra.mxu0 0.0
        %1673 = vmatprep.subr.mxu0 0.0
        %1674 = vmatpush2.msra.mxu0 0.0
        %1675 = vmatprep.subr.mxu0 0.0
        %1676 = vmatpush2.msra.mxu0 0.0
        %1677 = vmatprep.subr.mxu0 0.0
        %1678 = vmatpush2.msra.mxu0 0.0
        %1679 = vmatprep.subr.mxu0 0.0
        %1680 = vmatpush2.msra.mxu0 0.0
        %1681 = vmatprep.subr.mxu0 0.0
        %1682 = vmatpush2.msra.mxu0 0.0
        %1683 = vmatprep.subr.mxu0 0.0
        %1684 = vmatpush2.msra.mxu0 0.0
        %1685 = vmatprep.subr.mxu0 0.0
        %1686 = vmatpush2.msra.mxu0 0.0
        %1687 = vmatprep.subr.mxu0 0.0
        %1688 = vmatpush2.msra.mxu0 0.0
        %1689 = vmatprep.subr.mxu0 0.0
        %1690 = vmatpush2.msra.mxu0 0.0
        %1691 = vmatprep.subr.mxu0 0.0
        %1692 = vmatpush2.msra.mxu0 0.0
        %1693 = vmatprep.mubr.f32.mxu0 0.0
        %v1694 = vand.u32 %v1465, 4294901760
        %1695 = vmatmul.mubr.f32.gmra.mxu0 %v1694
        %v1696 = vpop.f32.mrf.mxu0
        %v1697 = vadd.f32 %v1556, %v1696
        %v1698 = vpop.f32.mrf.mxu0
        %1699 = vmatprep.mubr.f32.mxu0 0.0
        %v1700 = vand.u32 %v1468, 4294901760
        %1701 = vmatmul.mubr.f32.gmra.mxu0 %v1700
        %v1702 = vpop.f32.mrf.mxu0
        %v1703 = vadd.f32 %v1566, %v1702
        %v1704 = vpop.f32.mrf.mxu0
        %1705 = vmatprep.mubr.f32.mxu0 0.0
        %v1706 = vand.u32 %v1471, 4294901760
        %1707 = vmatmul.mubr.f32.gmra.mxu0 %v1706
        %v1708 = vpop.f32.mrf.mxu0
        %v1709 = vadd.f32 %v1576, %v1708
        %v1710 = vpop.f32.mrf.mxu0
        %1711 = vmatprep.mubr.f32.mxu0 0.0
        %v1712 = vand.u32 %v1474, 4294901760
        %1713 = vmatmul.mubr.f32.gmra.mxu0 %v1712
        %v1714 = vpop.f32.mrf.mxu0
        %v1715 = vadd.f32 %v1586, %v1714
        %v1716 = vpop.f32.mrf.mxu0
        %1717 = vdwg.mxu0
        %1718 = vmatprep.subr.mxu0 0.0
        %1719 = vmatpush1.msra.mxu0 0.0
        %1720 = vmatprep.subr.mxu0 0.0
        %1721 = vmatpush1.msra.mxu0 0.0
        %1722 = vmatprep.subr.mxu0 0.0
        %1723 = vmatpush1.msra.mxu0 0.0
        %1724 = vmatprep.subr.mxu0 0.0
        %1725 = vmatpush1.msra.mxu0 0.0
        %1726 = vmatprep.subr.mxu0 0.0
        %1727 = vmatpush1.msra.mxu0 0.0
        %1728 = vmatprep.subr.mxu0 0.0
        %1729 = vmatpush1.msra.mxu0 0.0
        %1730 = vmatprep.subr.mxu0 0.0
        %1731 = vmatpush1.msra.mxu0 0.0
        %1732 = vmatprep.subr.mxu0 0.0
        %1733 = vmatpush1.msra.mxu0 0.0
        %1734 = vmatprep.subr.mxu0 0.0
        %v1735 = vand.u32 %v1434, 4294901760
        %v1736 = vsub.f32 %v1434, %v1735
        %1737 = vmatpush1.msra.mxu0 %v1736
        %1738 = vmatprep.subr.mxu0 0.0
        %v1739 = vand.u32 %v1433, 4294901760
        %v1740 = vsub.f32 %v1433, %v1739
        %1741 = vmatpush1.msra.mxu0 %v1740
        %1742 = vmatprep.subr.mxu0 0.0
        %v1743 = vand.u32 %v1432, 4294901760
        %v1744 = vsub.f32 %v1432, %v1743
        %1745 = vmatpush1.msra.mxu0 %v1744
        %1746 = vmatprep.subr.mxu0 0.0
        %v1747 = vand.u32 %v1431, 4294901760
        %v1748 = vsub.f32 %v1431, %v1747
        %1749 = vmatpush1.msra.mxu0 %v1748
        %1750 = vmatprep.subr.mxu0 0.0
        %v1751 = vand.u32 %v1430, 4294901760
        %v1752 = vsub.f32 %v1430, %v1751
        %1753 = vmatpush1.msra.mxu0 %v1752
        %1754 = vmatprep.subr.mxu0 0.0
        %v1755 = vand.u32 %v1429, 4294901760
        %v1756 = vsub.f32 %v1429, %v1755
        %1757 = vmatpush1.msra.mxu0 %v1756
        %1758 = vmatprep.subr.mxu0 0.0
        %v1759 = vand.u32 %v1428, 4294901760
        %v1760 = vsub.f32 %v1428, %v1759
        %1761 = vmatpush1.msra.mxu0 %v1760
        %1762 = vmatprep.subr.mxu0 0.0
        %v1763 = vand.u32 %v1427, 4294901760
        %v1764 = vsub.f32 %v1427, %v1763
        %1765 = vmatpush1.msra.mxu0 %v1764
        %1766 = vmatprep.subr.mxu0 0.0
        %1767 = vmatpush2.msra.mxu0 0.0
        %1768 = vmatprep.subr.mxu0 0.0
        %1769 = vmatpush2.msra.mxu0 0.0
        %1770 = vmatprep.subr.mxu0 0.0
        %1771 = vmatpush2.msra.mxu0 0.0
        %1772 = vmatprep.subr.mxu0 0.0
        %1773 = vmatpush2.msra.mxu0 0.0
        %1774 = vmatprep.subr.mxu0 0.0
        %1775 = vmatpush2.msra.mxu0 0.0
        %1776 = vmatprep.subr.mxu0 0.0
        %1777 = vmatpush2.msra.mxu0 0.0
        %1778 = vmatprep.subr.mxu0 0.0
        %1779 = vmatpush2.msra.mxu0 0.0
        %1780 = vmatprep.subr.mxu0 0.0
        %1781 = vmatpush2.msra.mxu0 0.0
        %1782 = vmatprep.subr.mxu0 0.0
        %1783 = vmatpush2.msra.mxu0 0.0
        %1784 = vmatprep.subr.mxu0 0.0
        %1785 = vmatpush2.msra.mxu0 0.0
        %1786 = vmatprep.subr.mxu0 0.0
        %1787 = vmatpush2.msra.mxu0 0.0
        %1788 = vmatprep.subr.mxu0 0.0
        %1789 = vmatpush2.msra.mxu0 0.0
        %1790 = vmatprep.subr.mxu0 0.0
        %1791 = vmatpush2.msra.mxu0 0.0
        %1792 = vmatprep.subr.mxu0 0.0
        %1793 = vmatpush2.msra.mxu0 0.0
        %1794 = vmatprep.subr.mxu0 0.0
        %1795 = vmatpush2.msra.mxu0 0.0
        %1796 = vmatprep.subr.mxu0 0.0
        %1797 = vmatpush2.msra.mxu0 0.0
        %1798 = vmatprep.mubr.f32.mxu0 0.0
        %v1799 = vand.u32 %v1465, 4294901760
        %v1800 = vsub.f32 %v1465, %v1799
        %1801 = vmatmul.mubr.f32.gmra.mxu0 %v1800
        %v1802 = vpop.f32.mrf.mxu0
        %v1803 = vadd.f32 %v1697, %v1802
        %v1804 = vpop.f32.mrf.mxu0
        %1805 = vmatprep.mubr.f32.mxu0 0.0
        %v1806 = vand.u32 %v1468, 4294901760
        %v1807 = vsub.f32 %v1468, %v1806
        %1808 = vmatmul.mubr.f32.gmra.mxu0 %v1807
        %v1809 = vpop.f32.mrf.mxu0
        %v1810 = vadd.f32 %v1703, %v1809
        %v1811 = vpop.f32.mrf.mxu0
        %1812 = vmatprep.mubr.f32.mxu0 0.0
        %v1813 = vand.u32 %v1471, 4294901760
        %v1814 = vsub.f32 %v1471, %v1813
        %1815 = vmatmul.mubr.f32.gmra.mxu0 %v1814
        %v1816 = vpop.f32.mrf.mxu0
        %v1817 = vadd.f32 %v1709, %v1816
        %v1818 = vpop.f32.mrf.mxu0
        %1819 = vmatprep.mubr.f32.mxu0 0.0
        %v1820 = vand.u32 %v1474, 4294901760
        %v1821 = vsub.f32 %v1474, %v1820
        %1822 = vmatmul.mubr.f32.gmra.mxu0 %v1821
        %v1823 = vpop.f32.mrf.mxu0
        %v1824 = vadd.f32 %v1715, %v1823
        %v1825 = vpop.f32.mrf.mxu0
        %1826 = vdwg.mxu0
        %1827 = vmatprep.subr.mxu0 0.0
        %1828 = vmatpush1.msra.mxu0 0.0
        %1829 = vmatprep.subr.mxu0 0.0
        %1830 = vmatpush1.msra.mxu0 0.0
        %1831 = vmatprep.subr.mxu0 0.0
        %1832 = vmatpush1.msra.mxu0 0.0
        %1833 = vmatprep.subr.mxu0 0.0
        %1834 = vmatpush1.msra.mxu0 0.0
        %1835 = vmatprep.subr.mxu0 0.0
        %1836 = vmatpush1.msra.mxu0 0.0
        %1837 = vmatprep.subr.mxu0 0.0
        %1838 = vmatpush1.msra.mxu0 0.0
        %1839 = vmatprep.subr.mxu0 0.0
        %1840 = vmatpush1.msra.mxu0 0.0
        %1841 = vmatprep.subr.mxu0 0.0
        %1842 = vmatpush1.msra.mxu0 0.0
        %1843 = vmatprep.subr.mxu0 0.0
        %v1844 = vand.u32 %v1434, 4294901760
        %1845 = vmatpush1.msra.mxu0 %v1844
        %1846 = vmatprep.subr.mxu0 0.0
        %v1847 = vand.u32 %v1433, 4294901760
        %1848 = vmatpush1.msra.mxu0 %v1847
        %1849 = vmatprep.subr.mxu0 0.0
        %v1850 = vand.u32 %v1432, 4294901760
        %1851 = vmatpush1.msra.mxu0 %v1850
        %1852 = vmatprep.subr.mxu0 0.0
        %v1853 = vand.u32 %v1431, 4294901760
        %1854 = vmatpush1.msra.mxu0 %v1853
        %1855 = vmatprep.subr.mxu0 0.0
        %v1856 = vand.u32 %v1430, 4294901760
        %1857 = vmatpush1.msra.mxu0 %v1856
        %1858 = vmatprep.subr.mxu0 0.0
        %v1859 = vand.u32 %v1429, 4294901760
        %1860 = vmatpush1.msra.mxu0 %v1859
        %1861 = vmatprep.subr.mxu0 0.0
        %v1862 = vand.u32 %v1428, 4294901760
        %1863 = vmatpush1.msra.mxu0 %v1862
        %1864 = vmatprep.subr.mxu0 0.0
        %v1865 = vand.u32 %v1427, 4294901760
        %1866 = vmatpush1.msra.mxu0 %v1865
        %1867 = vmatprep.subr.mxu0 0.0
        %1868 = vmatpush2.msra.mxu0 0.0
        %1869 = vmatprep.subr.mxu0 0.0
        %1870 = vmatpush2.msra.mxu0 0.0
        %1871 = vmatprep.subr.mxu0 0.0
        %1872 = vmatpush2.msra.mxu0 0.0
        %1873 = vmatprep.subr.mxu0 0.0
        %1874 = vmatpush2.msra.mxu0 0.0
        %1875 = vmatprep.subr.mxu0 0.0
        %1876 = vmatpush2.msra.mxu0 0.0
        %1877 = vmatprep.subr.mxu0 0.0
        %1878 = vmatpush2.msra.mxu0 0.0
        %1879 = vmatprep.subr.mxu0 0.0
        %1880 = vmatpush2.msra.mxu0 0.0
        %1881 = vmatprep.subr.mxu0 0.0
        %1882 = vmatpush2.msra.mxu0 0.0
        %1883 = vmatprep.subr.mxu0 0.0
        %1884 = vmatpush2.msra.mxu0 0.0
        %1885 = vmatprep.subr.mxu0 0.0
        %1886 = vmatpush2.msra.mxu0 0.0
        %1887 = vmatprep.subr.mxu0 0.0
        %1888 = vmatpush2.msra.mxu0 0.0
        %1889 = vmatprep.subr.mxu0 0.0
        %1890 = vmatpush2.msra.mxu0 0.0
        %1891 = vmatprep.subr.mxu0 0.0
        %1892 = vmatpush2.msra.mxu0 0.0
        %1893 = vmatprep.subr.mxu0 0.0
        %1894 = vmatpush2.msra.mxu0 0.0
        %1895 = vmatprep.subr.mxu0 0.0
        %1896 = vmatpush2.msra.mxu0 0.0
        %1897 = vmatprep.subr.mxu0 0.0
        %1898 = vmatpush2.msra.mxu0 0.0
        %1899 = vmatprep.mubr.f32.mxu0 0.0
        %v1900 = vand.u32 %v1465, 4294901760
        %v1901 = vsub.f32 %v1465, %v1900
        %v1902 = vand.u32 %v1901, 4294901760
        %1903 = vmatmul.mubr.f32.gmra.mxu0 %v1902
        %v1904 = vpop.f32.mrf.mxu0
        %v1905 = vadd.f32 %v1803, %v1904
        %v1906 = vpop.f32.mrf.mxu0
        %1907 = vmatprep.mubr.f32.mxu0 0.0
        %v1908 = vand.u32 %v1468, 4294901760
        %v1909 = vsub.f32 %v1468, %v1908
        %v1910 = vand.u32 %v1909, 4294901760
        %1911 = vmatmul.mubr.f32.gmra.mxu0 %v1910
        %v1912 = vpop.f32.mrf.mxu0
        %v1913 = vadd.f32 %v1810, %v1912
        %v1914 = vpop.f32.mrf.mxu0
        %1915 = vmatprep.mubr.f32.mxu0 0.0
        %v1916 = vand.u32 %v1471, 4294901760
        %v1917 = vsub.f32 %v1471, %v1916
        %v1918 = vand.u32 %v1917, 4294901760
        %1919 = vmatmul.mubr.f32.gmra.mxu0 %v1918
        %v1920 = vpop.f32.mrf.mxu0
        %v1921 = vadd.f32 %v1817, %v1920
        %v1922 = vpop.f32.mrf.mxu0
        %1923 = vmatprep.mubr.f32.mxu0 0.0
        %v1924 = vand.u32 %v1474, 4294901760
        %v1925 = vsub.f32 %v1474, %v1924
        %v1926 = vand.u32 %v1925, 4294901760
        %1927 = vmatmul.mubr.f32.gmra.mxu0 %v1926
        %v1928 = vpop.f32.mrf.mxu0
        %v1929 = vadd.f32 %v1824, %v1928
        %v1930 = vpop.f32.mrf.mxu0
        %1931 = vdwg.mxu0
        %1932 = vmatprep.subr.mxu0 0.0
        %1933 = vmatpush1.msra.mxu0 0.0
        %1934 = vmatprep.subr.mxu0 0.0
        %1935 = vmatpush1.msra.mxu0 0.0
        %1936 = vmatprep.subr.mxu0 0.0
        %1937 = vmatpush1.msra.mxu0 0.0
        %1938 = vmatprep.subr.mxu0 0.0
        %1939 = vmatpush1.msra.mxu0 0.0
        %1940 = vmatprep.subr.mxu0 0.0
        %1941 = vmatpush1.msra.mxu0 0.0
        %1942 = vmatprep.subr.mxu0 0.0
        %1943 = vmatpush1.msra.mxu0 0.0
        %1944 = vmatprep.subr.mxu0 0.0
        %1945 = vmatpush1.msra.mxu0 0.0
        %1946 = vmatprep.subr.mxu0 0.0
        %1947 = vmatpush1.msra.mxu0 0.0
        %1948 = vmatprep.subr.mxu0 0.0
        %v1949 = vand.u32 %v1434, 4294901760
        %v1950 = vsub.f32 %v1434, %v1949
        %v1951 = vand.u32 %v1950, 4294901760
        %1952 = vmatpush1.msra.mxu0 %v1951
        %1953 = vmatprep.subr.mxu0 0.0
        %v1954 = vand.u32 %v1433, 4294901760
        %v1955 = vsub.f32 %v1433, %v1954
        %v1956 = vand.u32 %v1955, 4294901760
        %1957 = vmatpush1.msra.mxu0 %v1956
        %1958 = vmatprep.subr.mxu0 0.0
        %v1959 = vand.u32 %v1432, 4294901760
        %v1960 = vsub.f32 %v1432, %v1959
        %v1961 = vand.u32 %v1960, 4294901760
        %1962 = vmatpush1.msra.mxu0 %v1961
        %1963 = vmatprep.subr.mxu0 0.0
        %v1964 = vand.u32 %v1431, 4294901760
        %v1965 = vsub.f32 %v1431, %v1964
        %v1966 = vand.u32 %v1965, 4294901760
        %1967 = vmatpush1.msra.mxu0 %v1966
        %1968 = vmatprep.subr.mxu0 0.0
        %v1969 = vand.u32 %v1430, 4294901760
        %v1970 = vsub.f32 %v1430, %v1969
        %v1971 = vand.u32 %v1970, 4294901760
        %1972 = vmatpush1.msra.mxu0 %v1971
        %1973 = vmatprep.subr.mxu0 0.0
        %v1974 = vand.u32 %v1429, 4294901760
        %v1975 = vsub.f32 %v1429, %v1974
        %v1976 = vand.u32 %v1975, 4294901760
        %1977 = vmatpush1.msra.mxu0 %v1976
        %1978 = vmatprep.subr.mxu0 0.0
        %v1979 = vand.u32 %v1428, 4294901760
        %v1980 = vsub.f32 %v1428, %v1979
        %v1981 = vand.u32 %v1980, 4294901760
        %1982 = vmatpush1.msra.mxu0 %v1981
        %1983 = vmatprep.subr.mxu0 0.0
        %v1984 = vand.u32 %v1427, 4294901760
        %v1985 = vsub.f32 %v1427, %v1984
        %v1986 = vand.u32 %v1985, 4294901760
        %1987 = vmatpush1.msra.mxu0 %v1986
        %1988 = vmatprep.subr.mxu0 0.0
        %1989 = vmatpush2.msra.mxu0 0.0
        %1990 = vmatprep.subr.mxu0 0.0
        %1991 = vmatpush2.msra.mxu0 0.0
        %1992 = vmatprep.subr.mxu0 0.0
        %1993 = vmatpush2.msra.mxu0 0.0
        %1994 = vmatprep.subr.mxu0 0.0
        %1995 = vmatpush2.msra.mxu0 0.0
        %1996 = vmatprep.subr.mxu0 0.0
        %1997 = vmatpush2.msra.mxu0 0.0
        %1998 = vmatprep.subr.mxu0 0.0
        %1999 = vmatpush2.msra.mxu0 0.0
        %2000 = vmatprep.subr.mxu0 0.0
        %2001 = vmatpush2.msra.mxu0 0.0
        %2002 = vmatprep.subr.mxu0 0.0
        %2003 = vmatpush2.msra.mxu0 0.0
        %2004 = vmatprep.subr.mxu0 0.0
        %2005 = vmatpush2.msra.mxu0 0.0
        %2006 = vmatprep.subr.mxu0 0.0
        %2007 = vmatpush2.msra.mxu0 0.0
        %2008 = vmatprep.subr.mxu0 0.0
        %2009 = vmatpush2.msra.mxu0 0.0
        %2010 = vmatprep.subr.mxu0 0.0
        %2011 = vmatpush2.msra.mxu0 0.0
        %2012 = vmatprep.subr.mxu0 0.0
        %2013 = vmatpush2.msra.mxu0 0.0
        %2014 = vmatprep.subr.mxu0 0.0
        %2015 = vmatpush2.msra.mxu0 0.0
        %2016 = vmatprep.subr.mxu0 0.0
        %2017 = vmatpush2.msra.mxu0 0.0
        %2018 = vmatprep.subr.mxu0 0.0
        %2019 = vmatpush2.msra.mxu0 0.0
        %2020 = vmatprep.mubr.f32.mxu0 0.0
        %v2021 = vand.u32 %v1465, 4294901760
        %2022 = vmatmul.mubr.f32.gmra.mxu0 %v2021
        %v2023 = vpop.f32.mrf.mxu0
        %v2024 = vadd.f32 %v1905, %v2023
        %v2025 = vpop.f32.mrf.mxu0
        %2026 = vmatprep.mubr.f32.mxu0 0.0
        %v2027 = vand.u32 %v1468, 4294901760
        %2028 = vmatmul.mubr.f32.gmra.mxu0 %v2027
        %v2029 = vpop.f32.mrf.mxu0
        %v2030 = vadd.f32 %v1913, %v2029
        %v2031 = vpop.f32.mrf.mxu0
        %2032 = vmatprep.mubr.f32.mxu0 0.0
        %v2033 = vand.u32 %v1471, 4294901760
        %2034 = vmatmul.mubr.f32.gmra.mxu0 %v2033
        %v2035 = vpop.f32.mrf.mxu0
        %v2036 = vadd.f32 %v1921, %v2035
        %v2037 = vpop.f32.mrf.mxu0
        %2038 = vmatprep.mubr.f32.mxu0 0.0
        %v2039 = vand.u32 %v1474, 4294901760
        %2040 = vmatmul.mubr.f32.gmra.mxu0 %v2039
        %v2041 = vpop.f32.mrf.mxu0
        %v2042 = vadd.f32 %v1929, %v2041
        %v2043 = vpop.f32.mrf.mxu0
        %2044 = vdwg.mxu0
        %2045 = vmatprep.subr.mxu0 0.0
        %2046 = vmatpush1.msra.mxu0 0.0
        %2047 = vmatprep.subr.mxu0 0.0
        %2048 = vmatpush1.msra.mxu0 0.0
        %2049 = vmatprep.subr.mxu0 0.0
        %2050 = vmatpush1.msra.mxu0 0.0
        %2051 = vmatprep.subr.mxu0 0.0
        %2052 = vmatpush1.msra.mxu0 0.0
        %2053 = vmatprep.subr.mxu0 0.0
        %2054 = vmatpush1.msra.mxu0 0.0
        %2055 = vmatprep.subr.mxu0 0.0
        %2056 = vmatpush1.msra.mxu0 0.0
        %2057 = vmatprep.subr.mxu0 0.0
        %2058 = vmatpush1.msra.mxu0 0.0
        %2059 = vmatprep.subr.mxu0 0.0
        %2060 = vmatpush1.msra.mxu0 0.0
        %2061 = vmatprep.subr.mxu0 0.0
        %v2062 = vand.u32 %v1434, 4294901760
        %2063 = vmatpush1.msra.mxu0 %v2062
        %2064 = vmatprep.subr.mxu0 0.0
        %v2065 = vand.u32 %v1433, 4294901760
        %2066 = vmatpush1.msra.mxu0 %v2065
        %2067 = vmatprep.subr.mxu0 0.0
        %v2068 = vand.u32 %v1432, 4294901760
        %2069 = vmatpush1.msra.mxu0 %v2068
        %2070 = vmatprep.subr.mxu0 0.0
        %v2071 = vand.u32 %v1431, 4294901760
        %2072 = vmatpush1.msra.mxu0 %v2071
        %2073 = vmatprep.subr.mxu0 0.0
        %v2074 = vand.u32 %v1430, 4294901760
        %2075 = vmatpush1.msra.mxu0 %v2074
        %2076 = vmatprep.subr.mxu0 0.0
        %v2077 = vand.u32 %v1429, 4294901760
        %2078 = vmatpush1.msra.mxu0 %v2077
        %2079 = vmatprep.subr.mxu0 0.0
        %v2080 = vand.u32 %v1428, 4294901760
        %2081 = vmatpush1.msra.mxu0 %v2080
        %2082 = vmatprep.subr.mxu0 0.0
        %v2083 = vand.u32 %v1427, 4294901760
        %2084 = vmatpush1.msra.mxu0 %v2083
        %2085 = vmatprep.subr.mxu0 0.0
        %2086 = vmatpush2.msra.mxu0 0.0
        %2087 = vmatprep.subr.mxu0 0.0
        %2088 = vmatpush2.msra.mxu0 0.0
        %2089 = vmatprep.subr.mxu0 0.0
        %2090 = vmatpush2.msra.mxu0 0.0
        %2091 = vmatprep.subr.mxu0 0.0
        %2092 = vmatpush2.msra.mxu0 0.0
        %2093 = vmatprep.subr.mxu0 0.0
        %2094 = vmatpush2.msra.mxu0 0.0
        %2095 = vmatprep.subr.mxu0 0.0
        %2096 = vmatpush2.msra.mxu0 0.0
        %2097 = vmatprep.subr.mxu0 0.0
        %2098 = vmatpush2.msra.mxu0 0.0
        %2099 = vmatprep.subr.mxu0 0.0
        %2100 = vmatpush2.msra.mxu0 0.0
        %2101 = vmatprep.subr.mxu0 0.0
        %2102 = vmatpush2.msra.mxu0 0.0
        %2103 = vmatprep.subr.mxu0 0.0
        %2104 = vmatpush2.msra.mxu0 0.0
        %2105 = vmatprep.subr.mxu0 0.0
        %2106 = vmatpush2.msra.mxu0 0.0
        %2107 = vmatprep.subr.mxu0 0.0
        %2108 = vmatpush2.msra.mxu0 0.0
        %2109 = vmatprep.subr.mxu0 0.0
        %2110 = vmatpush2.msra.mxu0 0.0
        %2111 = vmatprep.subr.mxu0 0.0
        %2112 = vmatpush2.msra.mxu0 0.0
        %2113 = vmatprep.subr.mxu0 0.0
        %2114 = vmatpush2.msra.mxu0 0.0
        %2115 = vmatprep.subr.mxu0 0.0
        %2116 = vmatpush2.msra.mxu0 0.0
        %2117 = vmatprep.mubr.f32.mxu0 0.0
        %v2118 = vand.u32 %v1465, 4294901760
        %2119 = vmatmul.mubr.f32.gmra.mxu0 %v2118
        %v2120 = vpop.f32.mrf.mxu0
        %v2121 = vadd.f32 %v2024, %v2120
        %v2122 = vpop.f32.mrf.mxu0
        %2123 = vmatprep.mubr.f32.mxu0 0.0
        %v2124 = vand.u32 %v1468, 4294901760
        %2125 = vmatmul.mubr.f32.gmra.mxu0 %v2124
        %v2126 = vpop.f32.mrf.mxu0
        %v2127 = vadd.f32 %v2030, %v2126
        %v2128 = vpop.f32.mrf.mxu0
        %2129 = vmatprep.mubr.f32.mxu0 0.0
        %v2130 = vand.u32 %v1471, 4294901760
        %2131 = vmatmul.mubr.f32.gmra.mxu0 %v2130
        %v2132 = vpop.f32.mrf.mxu0
        %v2133 = vadd.f32 %v2036, %v2132
        %v2134 = vpop.f32.mrf.mxu0
        %2135 = vmatprep.mubr.f32.mxu0 0.0
        %v2136 = vand.u32 %v1474, 4294901760
        %2137 = vmatmul.mubr.f32.gmra.mxu0 %v2136
        %v2138 = vpop.f32.mrf.mxu0
        %v2139 = vadd.f32 %v2042, %v2138
        %v2140 = vpop.f32.mrf.mxu0
        %2141 = vdwg.mxu0
        %v2142 = vld [vmem:[%s6] sm:$0xff]
        %v2143 = vld [vmem:[%s6 + $0x8] sm:$0xff]
        %v2144 = vld [vmem:[%s6 + $0x10] sm:$0xff]
        %v2145 = vld [vmem:[%s6 + $0x18] sm:$0xff]
        %v2146 = vld [vmem:[%s7] sm:$0xff]
        %v2147 = vld [vmem:[%s7 + $0x8] sm:$0xff]
        %v2148 = vld [vmem:[%s7 + $0x10] sm:$0xff]
        %v2149 = vld [vmem:[%s7 + $0x18] sm:$0xff]
        %2151 = vset.pattern.permute.xlu0 0
        %2152 = vperm.xlu0 %2151, %v2146
        %v2153 = vpop.permute.xlu0 %2152
        %2156 = vset.pattern.permute.xlu0 0
        %2157 = vperm.xlu0 %2156, %v2147
        %v2158 = vpop.permute.xlu0 %2157
        %2161 = vset.pattern.permute.xlu0 0
        %2162 = vperm.xlu0 %2161, %v2148
        %v2163 = vpop.permute.xlu0 %2162
        %2166 = vset.pattern.permute.xlu0 0
        %2167 = vperm.xlu0 %2166, %v2149
        %v2168 = vpop.permute.xlu0 %2167
        %v2171 = vsel %vm1463, %v2142, 0
        %v2174 = vsel %vm1463, %v2143, 0
        %v2177 = vsel %vm1463, %v2144, 0
        %v2180 = vsel %vm1463, %v2145, 0
        %2182 = vmatprep.subr.mxu0 0.0
        %2183 = vmatpush1.msra.mxu0 0.0
        %2184 = vmatprep.subr.mxu0 0.0
        %2185 = vmatpush1.msra.mxu0 0.0
        %2186 = vmatprep.subr.mxu0 0.0
        %2187 = vmatpush1.msra.mxu0 0.0
        %2188 = vmatprep.subr.mxu0 0.0
        %2189 = vmatpush1.msra.mxu0 0.0
        %2190 = vmatprep.subr.mxu0 0.0
        %2191 = vmatpush1.msra.mxu0 0.0
        %2192 = vmatprep.subr.mxu0 0.0
        %2193 = vmatpush1.msra.mxu0 0.0
        %2194 = vmatprep.subr.mxu0 0.0
        %2195 = vmatpush1.msra.mxu0 0.0
        %2196 = vmatprep.subr.mxu0 0.0
        %2197 = vmatpush1.msra.mxu0 0.0
        %2198 = vmatprep.subr.mxu0 0.0
        %v2199 = vand.u32 %v1434, 4294901760
        %2200 = vmatpush1.msra.mxu0 %v2199
        %2201 = vmatprep.subr.mxu0 0.0
        %v2202 = vand.u32 %v1433, 4294901760
        %2203 = vmatpush1.msra.mxu0 %v2202
        %2204 = vmatprep.subr.mxu0 0.0
        %v2205 = vand.u32 %v1432, 4294901760
        %2206 = vmatpush1.msra.mxu0 %v2205
        %2207 = vmatprep.subr.mxu0 0.0
        %v2208 = vand.u32 %v1431, 4294901760
        %2209 = vmatpush1.msra.mxu0 %v2208
        %2210 = vmatprep.subr.mxu0 0.0
        %v2211 = vand.u32 %v1430, 4294901760
        %2212 = vmatpush1.msra.mxu0 %v2211
        %2213 = vmatprep.subr.mxu0 0.0
        %v2214 = vand.u32 %v1429, 4294901760
        %2215 = vmatpush1.msra.mxu0 %v2214
        %2216 = vmatprep.subr.mxu0 0.0
        %v2217 = vand.u32 %v1428, 4294901760
        %2218 = vmatpush1.msra.mxu0 %v2217
        %2219 = vmatprep.subr.mxu0 0.0
        %v2220 = vand.u32 %v1427, 4294901760
        %2221 = vmatpush1.msra.mxu0 %v2220
        %2222 = vmatprep.subr.mxu0 0.0
        %2223 = vmatpush2.msra.mxu0 0.0
        %2224 = vmatprep.subr.mxu0 0.0
        %2225 = vmatpush2.msra.mxu0 0.0
        %2226 = vmatprep.subr.mxu0 0.0
        %2227 = vmatpush2.msra.mxu0 0.0
        %2228 = vmatprep.subr.mxu0 0.0
        %2229 = vmatpush2.msra.mxu0 0.0
        %2230 = vmatprep.subr.mxu0 0.0
        %2231 = vmatpush2.msra.mxu0 0.0
        %2232 = vmatprep.subr.mxu0 0.0
        %2233 = vmatpush2.msra.mxu0 0.0
        %2234 = vmatprep.subr.mxu0 0.0
        %2235 = vmatpush2.msra.mxu0 0.0
        %2236 = vmatprep.subr.mxu0 0.0
        %2237 = vmatpush2.msra.mxu0 0.0
        %2238 = vmatprep.subr.mxu0 0.0
        %2239 = vmatpush2.msra.mxu0 0.0
        %2240 = vmatprep.subr.mxu0 0.0
        %2241 = vmatpush2.msra.mxu0 0.0
        %2242 = vmatprep.subr.mxu0 0.0
        %2243 = vmatpush2.msra.mxu0 0.0
        %2244 = vmatprep.subr.mxu0 0.0
        %2245 = vmatpush2.msra.mxu0 0.0
        %2246 = vmatprep.subr.mxu0 0.0
        %2247 = vmatpush2.msra.mxu0 0.0
        %2248 = vmatprep.subr.mxu0 0.0
        %2249 = vmatpush2.msra.mxu0 0.0
        %2250 = vmatprep.subr.mxu0 0.0
        %2251 = vmatpush2.msra.mxu0 0.0
        %2252 = vmatprep.subr.mxu0 0.0
        %2253 = vmatpush2.msra.mxu0 0.0
        %2254 = vmatprep.mubr.f32.mxu0 0.0
        %v2255 = vand.u32 %v2171, 4294901760
        %v2256 = vsub.f32 %v2171, %v2255
        %v2257 = vand.u32 %v2256, 4294901760
        %v2258 = vsub.f32 %v2256, %v2257
        %v2259 = vand.u32 %v2258, 4294901760
        %2260 = vmatmul.mubr.f32.gmra.mxu0 %v2259
        %v2261 = vpop.f32.mrf.mxu0
        %v2262 = vadd.f32 %v2153, %v2261
        %v2263 = vpop.f32.mrf.mxu0
        %2264 = vmatprep.mubr.f32.mxu0 0.0
        %v2265 = vand.u32 %v2174, 4294901760
        %v2266 = vsub.f32 %v2174, %v2265
        %v2267 = vand.u32 %v2266, 4294901760
        %v2268 = vsub.f32 %v2266, %v2267
        %v2269 = vand.u32 %v2268, 4294901760
        %2270 = vmatmul.mubr.f32.gmra.mxu0 %v2269
        %v2271 = vpop.f32.mrf.mxu0
        %v2272 = vadd.f32 %v2158, %v2271
        %v2273 = vpop.f32.mrf.mxu0
        %2274 = vmatprep.mubr.f32.mxu0 0.0
        %v2275 = vand.u32 %v2177, 4294901760
        %v2276 = vsub.f32 %v2177, %v2275
        %v2277 = vand.u32 %v2276, 4294901760
        %v2278 = vsub.f32 %v2276, %v2277
        %v2279 = vand.u32 %v2278, 4294901760
        %2280 = vmatmul.mubr.f32.gmra.mxu0 %v2279
        %v2281 = vpop.f32.mrf.mxu0
        %v2282 = vadd.f32 %v2163, %v2281
        %v2283 = vpop.f32.mrf.mxu0
        %2284 = vmatprep.mubr.f32.mxu0 0.0
        %v2285 = vand.u32 %v2180, 4294901760
        %v2286 = vsub.f32 %v2180, %v2285
        %v2287 = vand.u32 %v2286, 4294901760
        %v2288 = vsub.f32 %v2286, %v2287
        %v2289 = vand.u32 %v2288, 4294901760
        %2290 = vmatmul.mubr.f32.gmra.mxu0 %v2289
        %v2291 = vpop.f32.mrf.mxu0
        %v2292 = vadd.f32 %v2168, %v2291
        %v2293 = vpop.f32.mrf.mxu0
        %2294 = vdwg.mxu0
        %2295 = vmatprep.subr.mxu0 0.0
        %2296 = vmatpush1.msra.mxu0 0.0
        %2297 = vmatprep.subr.mxu0 0.0
        %2298 = vmatpush1.msra.mxu0 0.0
        %2299 = vmatprep.subr.mxu0 0.0
        %2300 = vmatpush1.msra.mxu0 0.0
        %2301 = vmatprep.subr.mxu0 0.0
        %2302 = vmatpush1.msra.mxu0 0.0
        %2303 = vmatprep.subr.mxu0 0.0
        %2304 = vmatpush1.msra.mxu0 0.0
        %2305 = vmatprep.subr.mxu0 0.0
        %2306 = vmatpush1.msra.mxu0 0.0
        %2307 = vmatprep.subr.mxu0 0.0
        %2308 = vmatpush1.msra.mxu0 0.0
        %2309 = vmatprep.subr.mxu0 0.0
        %2310 = vmatpush1.msra.mxu0 0.0
        %2311 = vmatprep.subr.mxu0 0.0
        %v2312 = vand.u32 %v1434, 4294901760
        %v2313 = vsub.f32 %v1434, %v2312
        %v2314 = vand.u32 %v2313, 4294901760
        %v2315 = vsub.f32 %v2313, %v2314
        %v2316 = vand.u32 %v2315, 4294901760
        %2317 = vmatpush1.msra.mxu0 %v2316
        %2318 = vmatprep.subr.mxu0 0.0
        %v2319 = vand.u32 %v1433, 4294901760
        %v2320 = vsub.f32 %v1433, %v2319
        %v2321 = vand.u32 %v2320, 4294901760
        %v2322 = vsub.f32 %v2320, %v2321
        %v2323 = vand.u32 %v2322, 4294901760
        %2324 = vmatpush1.msra.mxu0 %v2323
        %2325 = vmatprep.subr.mxu0 0.0
        %v2326 = vand.u32 %v1432, 4294901760
        %v2327 = vsub.f32 %v1432, %v2326
        %v2328 = vand.u32 %v2327, 4294901760
        %v2329 = vsub.f32 %v2327, %v2328
        %v2330 = vand.u32 %v2329, 4294901760
        %2331 = vmatpush1.msra.mxu0 %v2330
        %2332 = vmatprep.subr.mxu0 0.0
        %v2333 = vand.u32 %v1431, 4294901760
        %v2334 = vsub.f32 %v1431, %v2333
        %v2335 = vand.u32 %v2334, 4294901760
        %v2336 = vsub.f32 %v2334, %v2335
        %v2337 = vand.u32 %v2336, 4294901760
        %2338 = vmatpush1.msra.mxu0 %v2337
        %2339 = vmatprep.subr.mxu0 0.0
        %v2340 = vand.u32 %v1430, 4294901760
        %v2341 = vsub.f32 %v1430, %v2340
        %v2342 = vand.u32 %v2341, 4294901760
        %v2343 = vsub.f32 %v2341, %v2342
        %v2344 = vand.u32 %v2343, 4294901760
        %2345 = vmatpush1.msra.mxu0 %v2344
        %2346 = vmatprep.subr.mxu0 0.0
        %v2347 = vand.u32 %v1429, 4294901760
        %v2348 = vsub.f32 %v1429, %v2347
        %v2349 = vand.u32 %v2348, 4294901760
        %v2350 = vsub.f32 %v2348, %v2349
        %v2351 = vand.u32 %v2350, 4294901760
        %2352 = vmatpush1.msra.mxu0 %v2351
        %2353 = vmatprep.subr.mxu0 0.0
        %v2354 = vand.u32 %v1428, 4294901760
        %v2355 = vsub.f32 %v1428, %v2354
        %v2356 = vand.u32 %v2355, 4294901760
        %v2357 = vsub.f32 %v2355, %v2356
        %v2358 = vand.u32 %v2357, 4294901760
        %2359 = vmatpush1.msra.mxu0 %v2358
        %2360 = vmatprep.subr.mxu0 0.0
        %v2361 = vand.u32 %v1427, 4294901760
        %v2362 = vsub.f32 %v1427, %v2361
        %v2363 = vand.u32 %v2362, 4294901760
        %v2364 = vsub.f32 %v2362, %v2363
        %v2365 = vand.u32 %v2364, 4294901760
        %2366 = vmatpush1.msra.mxu0 %v2365
        %2367 = vmatprep.subr.mxu0 0.0
        %2368 = vmatpush2.msra.mxu0 0.0
        %2369 = vmatprep.subr.mxu0 0.0
        %2370 = vmatpush2.msra.mxu0 0.0
        %2371 = vmatprep.subr.mxu0 0.0
        %2372 = vmatpush2.msra.mxu0 0.0
        %2373 = vmatprep.subr.mxu0 0.0
        %2374 = vmatpush2.msra.mxu0 0.0
        %2375 = vmatprep.subr.mxu0 0.0
        %2376 = vmatpush2.msra.mxu0 0.0
        %2377 = vmatprep.subr.mxu0 0.0
        %2378 = vmatpush2.msra.mxu0 0.0
        %2379 = vmatprep.subr.mxu0 0.0
        %2380 = vmatpush2.msra.mxu0 0.0
        %2381 = vmatprep.subr.mxu0 0.0
        %2382 = vmatpush2.msra.mxu0 0.0
        %2383 = vmatprep.subr.mxu0 0.0
        %2384 = vmatpush2.msra.mxu0 0.0
        %2385 = vmatprep.subr.mxu0 0.0
        %2386 = vmatpush2.msra.mxu0 0.0
        %2387 = vmatprep.subr.mxu0 0.0
        %2388 = vmatpush2.msra.mxu0 0.0
        %2389 = vmatprep.subr.mxu0 0.0
        %2390 = vmatpush2.msra.mxu0 0.0
        %2391 = vmatprep.subr.mxu0 0.0
        %2392 = vmatpush2.msra.mxu0 0.0
        %2393 = vmatprep.subr.mxu0 0.0
        %2394 = vmatpush2.msra.mxu0 0.0
        %2395 = vmatprep.subr.mxu0 0.0
        %2396 = vmatpush2.msra.mxu0 0.0
        %2397 = vmatprep.subr.mxu0 0.0
        %2398 = vmatpush2.msra.mxu0 0.0
        %2399 = vmatprep.mubr.f32.mxu0 0.0
        %v2400 = vand.u32 %v2171, 4294901760
        %2401 = vmatmul.mubr.f32.gmra.mxu0 %v2400
        %v2402 = vpop.f32.mrf.mxu0
        %v2403 = vadd.f32 %v2262, %v2402
        %v2404 = vpop.f32.mrf.mxu0
        %2405 = vmatprep.mubr.f32.mxu0 0.0
        %v2406 = vand.u32 %v2174, 4294901760
        %2407 = vmatmul.mubr.f32.gmra.mxu0 %v2406
        %v2408 = vpop.f32.mrf.mxu0
        %v2409 = vadd.f32 %v2272, %v2408
        %v2410 = vpop.f32.mrf.mxu0
        %2411 = vmatprep.mubr.f32.mxu0 0.0
        %v2412 = vand.u32 %v2177, 4294901760
        %2413 = vmatmul.mubr.f32.gmra.mxu0 %v2412
        %v2414 = vpop.f32.mrf.mxu0
        %v2415 = vadd.f32 %v2282, %v2414
        %v2416 = vpop.f32.mrf.mxu0
        %2417 = vmatprep.mubr.f32.mxu0 0.0
        %v2418 = vand.u32 %v2180, 4294901760
        %2419 = vmatmul.mubr.f32.gmra.mxu0 %v2418
        %v2420 = vpop.f32.mrf.mxu0
        %v2421 = vadd.f32 %v2292, %v2420
        %v2422 = vpop.f32.mrf.mxu0
        %2423 = vdwg.mxu0
        %2424 = vmatprep.subr.mxu0 0.0
        %2425 = vmatpush1.msra.mxu0 0.0
        %2426 = vmatprep.subr.mxu0 0.0
        %2427 = vmatpush1.msra.mxu0 0.0
        %2428 = vmatprep.subr.mxu0 0.0
        %2429 = vmatpush1.msra.mxu0 0.0
        %2430 = vmatprep.subr.mxu0 0.0
        %2431 = vmatpush1.msra.mxu0 0.0
        %2432 = vmatprep.subr.mxu0 0.0
        %2433 = vmatpush1.msra.mxu0 0.0
        %2434 = vmatprep.subr.mxu0 0.0
        %2435 = vmatpush1.msra.mxu0 0.0
        %2436 = vmatprep.subr.mxu0 0.0
        %2437 = vmatpush1.msra.mxu0 0.0
        %2438 = vmatprep.subr.mxu0 0.0
        %2439 = vmatpush1.msra.mxu0 0.0
        %2440 = vmatprep.subr.mxu0 0.0
        %v2441 = vand.u32 %v1434, 4294901760
        %v2442 = vsub.f32 %v1434, %v2441
        %2443 = vmatpush1.msra.mxu0 %v2442
        %2444 = vmatprep.subr.mxu0 0.0
        %v2445 = vand.u32 %v1433, 4294901760
        %v2446 = vsub.f32 %v1433, %v2445
        %2447 = vmatpush1.msra.mxu0 %v2446
        %2448 = vmatprep.subr.mxu0 0.0
        %v2449 = vand.u32 %v1432, 4294901760
        %v2450 = vsub.f32 %v1432, %v2449
        %2451 = vmatpush1.msra.mxu0 %v2450
        %2452 = vmatprep.subr.mxu0 0.0
        %v2453 = vand.u32 %v1431, 4294901760
        %v2454 = vsub.f32 %v1431, %v2453
        %2455 = vmatpush1.msra.mxu0 %v2454
        %2456 = vmatprep.subr.mxu0 0.0
        %v2457 = vand.u32 %v1430, 4294901760
        %v2458 = vsub.f32 %v1430, %v2457
        %2459 = vmatpush1.msra.mxu0 %v2458
        %2460 = vmatprep.subr.mxu0 0.0
        %v2461 = vand.u32 %v1429, 4294901760
        %v2462 = vsub.f32 %v1429, %v2461
        %2463 = vmatpush1.msra.mxu0 %v2462
        %2464 = vmatprep.subr.mxu0 0.0
        %v2465 = vand.u32 %v1428, 4294901760
        %v2466 = vsub.f32 %v1428, %v2465
        %2467 = vmatpush1.msra.mxu0 %v2466
        %2468 = vmatprep.subr.mxu0 0.0
        %v2469 = vand.u32 %v1427, 4294901760
        %v2470 = vsub.f32 %v1427, %v2469
        %2471 = vmatpush1.msra.mxu0 %v2470
        %2472 = vmatprep.subr.mxu0 0.0
        %2473 = vmatpush2.msra.mxu0 0.0
        %2474 = vmatprep.subr.mxu0 0.0
        %2475 = vmatpush2.msra.mxu0 0.0
        %2476 = vmatprep.subr.mxu0 0.0
        %2477 = vmatpush2.msra.mxu0 0.0
        %2478 = vmatprep.subr.mxu0 0.0
        %2479 = vmatpush2.msra.mxu0 0.0
        %2480 = vmatprep.subr.mxu0 0.0
        %2481 = vmatpush2.msra.mxu0 0.0
        %2482 = vmatprep.subr.mxu0 0.0
        %2483 = vmatpush2.msra.mxu0 0.0
        %2484 = vmatprep.subr.mxu0 0.0
        %2485 = vmatpush2.msra.mxu0 0.0
        %2486 = vmatprep.subr.mxu0 0.0
        %2487 = vmatpush2.msra.mxu0 0.0
        %2488 = vmatprep.subr.mxu0 0.0
        %2489 = vmatpush2.msra.mxu0 0.0
        %2490 = vmatprep.subr.mxu0 0.0
        %2491 = vmatpush2.msra.mxu0 0.0
        %2492 = vmatprep.subr.mxu0 0.0
        %2493 = vmatpush2.msra.mxu0 0.0
        %2494 = vmatprep.subr.mxu0 0.0
        %2495 = vmatpush2.msra.mxu0 0.0
        %2496 = vmatprep.subr.mxu0 0.0
        %2497 = vmatpush2.msra.mxu0 0.0
        %2498 = vmatprep.subr.mxu0 0.0
        %2499 = vmatpush2.msra.mxu0 0.0
        %2500 = vmatprep.subr.mxu0 0.0
        %2501 = vmatpush2.msra.mxu0 0.0
        %2502 = vmatprep.subr.mxu0 0.0
        %2503 = vmatpush2.msra.mxu0 0.0
        %2504 = vmatprep.mubr.f32.mxu0 0.0
        %v2505 = vand.u32 %v2171, 4294901760
        %v2506 = vsub.f32 %v2171, %v2505
        %2507 = vmatmul.mubr.f32.gmra.mxu0 %v2506
        %v2508 = vpop.f32.mrf.mxu0
        %v2509 = vadd.f32 %v2403, %v2508
        %v2510 = vpop.f32.mrf.mxu0
        %2511 = vmatprep.mubr.f32.mxu0 0.0
        %v2512 = vand.u32 %v2174, 4294901760
        %v2513 = vsub.f32 %v2174, %v2512
        %2514 = vmatmul.mubr.f32.gmra.mxu0 %v2513
        %v2515 = vpop.f32.mrf.mxu0
        %v2516 = vadd.f32 %v2409, %v2515
        %v2517 = vpop.f32.mrf.mxu0
        %2518 = vmatprep.mubr.f32.mxu0 0.0
        %v2519 = vand.u32 %v2177, 4294901760
        %v2520 = vsub.f32 %v2177, %v2519
        %2521 = vmatmul.mubr.f32.gmra.mxu0 %v2520
        %v2522 = vpop.f32.mrf.mxu0
        %v2523 = vadd.f32 %v2415, %v2522
        %v2524 = vpop.f32.mrf.mxu0
        %2525 = vmatprep.mubr.f32.mxu0 0.0
        %v2526 = vand.u32 %v2180, 4294901760
        %v2527 = vsub.f32 %v2180, %v2526
        %2528 = vmatmul.mubr.f32.gmra.mxu0 %v2527
        %v2529 = vpop.f32.mrf.mxu0
        %v2530 = vadd.f32 %v2421, %v2529
        %v2531 = vpop.f32.mrf.mxu0
        %2532 = vdwg.mxu0
        %2533 = vmatprep.subr.mxu0 0.0
        %2534 = vmatpush1.msra.mxu0 0.0
        %2535 = vmatprep.subr.mxu0 0.0
        %2536 = vmatpush1.msra.mxu0 0.0
        %2537 = vmatprep.subr.mxu0 0.0
        %2538 = vmatpush1.msra.mxu0 0.0
        %2539 = vmatprep.subr.mxu0 0.0
        %2540 = vmatpush1.msra.mxu0 0.0
        %2541 = vmatprep.subr.mxu0 0.0
        %2542 = vmatpush1.msra.mxu0 0.0
        %2543 = vmatprep.subr.mxu0 0.0
        %2544 = vmatpush1.msra.mxu0 0.0
        %2545 = vmatprep.subr.mxu0 0.0
        %2546 = vmatpush1.msra.mxu0 0.0
        %2547 = vmatprep.subr.mxu0 0.0
        %2548 = vmatpush1.msra.mxu0 0.0
        %2549 = vmatprep.subr.mxu0 0.0
        %v2550 = vand.u32 %v1434, 4294901760
        %2551 = vmatpush1.msra.mxu0 %v2550
        %2552 = vmatprep.subr.mxu0 0.0
        %v2553 = vand.u32 %v1433, 4294901760
        %2554 = vmatpush1.msra.mxu0 %v2553
        %2555 = vmatprep.subr.mxu0 0.0
        %v2556 = vand.u32 %v1432, 4294901760
        %2557 = vmatpush1.msra.mxu0 %v2556
        %2558 = vmatprep.subr.mxu0 0.0
        %v2559 = vand.u32 %v1431, 4294901760
        %2560 = vmatpush1.msra.mxu0 %v2559
        %2561 = vmatprep.subr.mxu0 0.0
        %v2562 = vand.u32 %v1430, 4294901760
        %2563 = vmatpush1.msra.mxu0 %v2562
        %2564 = vmatprep.subr.mxu0 0.0
        %v2565 = vand.u32 %v1429, 4294901760
        %2566 = vmatpush1.msra.mxu0 %v2565
        %2567 = vmatprep.subr.mxu0 0.0
        %v2568 = vand.u32 %v1428, 4294901760
        %2569 = vmatpush1.msra.mxu0 %v2568
        %2570 = vmatprep.subr.mxu0 0.0
        %v2571 = vand.u32 %v1427, 4294901760
        %2572 = vmatpush1.msra.mxu0 %v2571
        %2573 = vmatprep.subr.mxu0 0.0
        %2574 = vmatpush2.msra.mxu0 0.0
        %2575 = vmatprep.subr.mxu0 0.0
        %2576 = vmatpush2.msra.mxu0 0.0
        %2577 = vmatprep.subr.mxu0 0.0
        %2578 = vmatpush2.msra.mxu0 0.0
        %2579 = vmatprep.subr.mxu0 0.0
        %2580 = vmatpush2.msra.mxu0 0.0
        %2581 = vmatprep.subr.mxu0 0.0
        %2582 = vmatpush2.msra.mxu0 0.0
        %2583 = vmatprep.subr.mxu0 0.0
        %2584 = vmatpush2.msra.mxu0 0.0
        %2585 = vmatprep.subr.mxu0 0.0
        %2586 = vmatpush2.msra.mxu0 0.0
        %2587 = vmatprep.subr.mxu0 0.0
        %2588 = vmatpush2.msra.mxu0 0.0
        %2589 = vmatprep.subr.mxu0 0.0
        %2590 = vmatpush2.msra.mxu0 0.0
        %2591 = vmatprep.subr.mxu0 0.0
        %2592 = vmatpush2.msra.mxu0 0.0
        %2593 = vmatprep.subr.mxu0 0.0
        %2594 = vmatpush2.msra.mxu0 0.0
        %2595 = vmatprep.subr.mxu0 0.0
        %2596 = vmatpush2.msra.mxu0 0.0
        %2597 = vmatprep.subr.mxu0 0.0
        %2598 = vmatpush2.msra.mxu0 0.0
        %2599 = vmatprep.subr.mxu0 0.0
        %2600 = vmatpush2.msra.mxu0 0.0
        %2601 = vmatprep.subr.mxu0 0.0
        %2602 = vmatpush2.msra.mxu0 0.0
        %2603 = vmatprep.subr.mxu0 0.0
        %2604 = vmatpush2.msra.mxu0 0.0
        %2605 = vmatprep.mubr.f32.mxu0 0.0
        %v2606 = vand.u32 %v2171, 4294901760
        %v2607 = vsub.f32 %v2171, %v2606
        %v2608 = vand.u32 %v2607, 4294901760
        %2609 = vmatmul.mubr.f32.gmra.mxu0 %v2608
        %v2610 = vpop.f32.mrf.mxu0
        %v2611 = vadd.f32 %v2509, %v2610
        %v2612 = vpop.f32.mrf.mxu0
        %2613 = vmatprep.mubr.f32.mxu0 0.0
        %v2614 = vand.u32 %v2174, 4294901760
        %v2615 = vsub.f32 %v2174, %v2614
        %v2616 = vand.u32 %v2615, 4294901760
        %2617 = vmatmul.mubr.f32.gmra.mxu0 %v2616
        %v2618 = vpop.f32.mrf.mxu0
        %v2619 = vadd.f32 %v2516, %v2618
        %v2620 = vpop.f32.mrf.mxu0
        %2621 = vmatprep.mubr.f32.mxu0 0.0
        %v2622 = vand.u32 %v2177, 4294901760
        %v2623 = vsub.f32 %v2177, %v2622
        %v2624 = vand.u32 %v2623, 4294901760
        %2625 = vmatmul.mubr.f32.gmra.mxu0 %v2624
        %v2626 = vpop.f32.mrf.mxu0
        %v2627 = vadd.f32 %v2523, %v2626
        %v2628 = vpop.f32.mrf.mxu0
        %2629 = vmatprep.mubr.f32.mxu0 0.0
        %v2630 = vand.u32 %v2180, 4294901760
        %v2631 = vsub.f32 %v2180, %v2630
        %v2632 = vand.u32 %v2631, 4294901760
        %2633 = vmatmul.mubr.f32.gmra.mxu0 %v2632
        %v2634 = vpop.f32.mrf.mxu0
        %v2635 = vadd.f32 %v2530, %v2634
        %v2636 = vpop.f32.mrf.mxu0
        %2637 = vdwg.mxu0
        %2638 = vmatprep.subr.mxu0 0.0
        %2639 = vmatpush1.msra.mxu0 0.0
        %2640 = vmatprep.subr.mxu0 0.0
        %2641 = vmatpush1.msra.mxu0 0.0
        %2642 = vmatprep.subr.mxu0 0.0
        %2643 = vmatpush1.msra.mxu0 0.0
        %2644 = vmatprep.subr.mxu0 0.0
        %2645 = vmatpush1.msra.mxu0 0.0
        %2646 = vmatprep.subr.mxu0 0.0
        %2647 = vmatpush1.msra.mxu0 0.0
        %2648 = vmatprep.subr.mxu0 0.0
        %2649 = vmatpush1.msra.mxu0 0.0
        %2650 = vmatprep.subr.mxu0 0.0
        %2651 = vmatpush1.msra.mxu0 0.0
        %2652 = vmatprep.subr.mxu0 0.0
        %2653 = vmatpush1.msra.mxu0 0.0
        %2654 = vmatprep.subr.mxu0 0.0
        %v2655 = vand.u32 %v1434, 4294901760
        %v2656 = vsub.f32 %v1434, %v2655
        %v2657 = vand.u32 %v2656, 4294901760
        %2658 = vmatpush1.msra.mxu0 %v2657
        %2659 = vmatprep.subr.mxu0 0.0
        %v2660 = vand.u32 %v1433, 4294901760
        %v2661 = vsub.f32 %v1433, %v2660
        %v2662 = vand.u32 %v2661, 4294901760
        %2663 = vmatpush1.msra.mxu0 %v2662
        %2664 = vmatprep.subr.mxu0 0.0
        %v2665 = vand.u32 %v1432, 4294901760
        %v2666 = vsub.f32 %v1432, %v2665
        %v2667 = vand.u32 %v2666, 4294901760
        %2668 = vmatpush1.msra.mxu0 %v2667
        %2669 = vmatprep.subr.mxu0 0.0
        %v2670 = vand.u32 %v1431, 4294901760
        %v2671 = vsub.f32 %v1431, %v2670
        %v2672 = vand.u32 %v2671, 4294901760
        %2673 = vmatpush1.msra.mxu0 %v2672
        %2674 = vmatprep.subr.mxu0 0.0
        %v2675 = vand.u32 %v1430, 4294901760
        %v2676 = vsub.f32 %v1430, %v2675
        %v2677 = vand.u32 %v2676, 4294901760
        %2678 = vmatpush1.msra.mxu0 %v2677
        %2679 = vmatprep.subr.mxu0 0.0
        %v2680 = vand.u32 %v1429, 4294901760
        %v2681 = vsub.f32 %v1429, %v2680
        %v2682 = vand.u32 %v2681, 4294901760
        %2683 = vmatpush1.msra.mxu0 %v2682
        %2684 = vmatprep.subr.mxu0 0.0
        %v2685 = vand.u32 %v1428, 4294901760
        %v2686 = vsub.f32 %v1428, %v2685
        %v2687 = vand.u32 %v2686, 4294901760
        %2688 = vmatpush1.msra.mxu0 %v2687
        %2689 = vmatprep.subr.mxu0 0.0
        %v2690 = vand.u32 %v1427, 4294901760
        %v2691 = vsub.f32 %v1427, %v2690
        %v2692 = vand.u32 %v2691, 4294901760
        %2693 = vmatpush1.msra.mxu0 %v2692
        %2694 = vmatprep.subr.mxu0 0.0
        %2695 = vmatpush2.msra.mxu0 0.0
        %2696 = vmatprep.subr.mxu0 0.0
        %2697 = vmatpush2.msra.mxu0 0.0
        %2698 = vmatprep.subr.mxu0 0.0
        %2699 = vmatpush2.msra.mxu0 0.0
        %2700 = vmatprep.subr.mxu0 0.0
        %2701 = vmatpush2.msra.mxu0 0.0
        %2702 = vmatprep.subr.mxu0 0.0
        %2703 = vmatpush2.msra.mxu0 0.0
        %2704 = vmatprep.subr.mxu0 0.0
        %2705 = vmatpush2.msra.mxu0 0.0
        %2706 = vmatprep.subr.mxu0 0.0
        %2707 = vmatpush2.msra.mxu0 0.0
        %2708 = vmatprep.subr.mxu0 0.0
        %2709 = vmatpush2.msra.mxu0 0.0
        %2710 = vmatprep.subr.mxu0 0.0
        %2711 = vmatpush2.msra.mxu0 0.0
        %2712 = vmatprep.subr.mxu0 0.0
        %2713 = vmatpush2.msra.mxu0 0.0
        %2714 = vmatprep.subr.mxu0 0.0
        %2715 = vmatpush2.msra.mxu0 0.0
        %2716 = vmatprep.subr.mxu0 0.0
        %2717 = vmatpush2.msra.mxu0 0.0
        %2718 = vmatprep.subr.mxu0 0.0
        %2719 = vmatpush2.msra.mxu0 0.0
        %2720 = vmatprep.subr.mxu0 0.0
        %2721 = vmatpush2.msra.mxu0 0.0
        %2722 = vmatprep.subr.mxu0 0.0
        %2723 = vmatpush2.msra.mxu0 0.0
        %2724 = vmatprep.subr.mxu0 0.0
        %2725 = vmatpush2.msra.mxu0 0.0
        %2726 = vmatprep.mubr.f32.mxu0 0.0
        %v2727 = vand.u32 %v2171, 4294901760
        %2728 = vmatmul.mubr.f32.gmra.mxu0 %v2727
        %v2729 = vpop.f32.mrf.mxu0
        %v2730 = vadd.f32 %v2611, %v2729
        %v2731 = vpop.f32.mrf.mxu0
        %2732 = vmatprep.mubr.f32.mxu0 0.0
        %v2733 = vand.u32 %v2174, 4294901760
        %2734 = vmatmul.mubr.f32.gmra.mxu0 %v2733
        %v2735 = vpop.f32.mrf.mxu0
        %v2736 = vadd.f32 %v2619, %v2735
        %v2737 = vpop.f32.mrf.mxu0
        %2738 = vmatprep.mubr.f32.mxu0 0.0
        %v2739 = vand.u32 %v2177, 4294901760
        %2740 = vmatmul.mubr.f32.gmra.mxu0 %v2739
        %v2741 = vpop.f32.mrf.mxu0
        %v2742 = vadd.f32 %v2627, %v2741
        %v2743 = vpop.f32.mrf.mxu0
        %2744 = vmatprep.mubr.f32.mxu0 0.0
        %v2745 = vand.u32 %v2180, 4294901760
        %2746 = vmatmul.mubr.f32.gmra.mxu0 %v2745
        %v2747 = vpop.f32.mrf.mxu0
        %v2748 = vadd.f32 %v2635, %v2747
        %v2749 = vpop.f32.mrf.mxu0
        %2750 = vdwg.mxu0
        %2751 = vmatprep.subr.mxu0 0.0
        %2752 = vmatpush1.msra.mxu0 0.0
        %2753 = vmatprep.subr.mxu0 0.0
        %2754 = vmatpush1.msra.mxu0 0.0
        %2755 = vmatprep.subr.mxu0 0.0
        %2756 = vmatpush1.msra.mxu0 0.0
        %2757 = vmatprep.subr.mxu0 0.0
        %2758 = vmatpush1.msra.mxu0 0.0
        %2759 = vmatprep.subr.mxu0 0.0
        %2760 = vmatpush1.msra.mxu0 0.0
        %2761 = vmatprep.subr.mxu0 0.0
        %2762 = vmatpush1.msra.mxu0 0.0
        %2763 = vmatprep.subr.mxu0 0.0
        %2764 = vmatpush1.msra.mxu0 0.0
        %2765 = vmatprep.subr.mxu0 0.0
        %2766 = vmatpush1.msra.mxu0 0.0
        %2767 = vmatprep.subr.mxu0 0.0
        %v2768 = vand.u32 %v1434, 4294901760
        %2769 = vmatpush1.msra.mxu0 %v2768
        %2770 = vmatprep.subr.mxu0 0.0
        %v2771 = vand.u32 %v1433, 4294901760
        %2772 = vmatpush1.msra.mxu0 %v2771
        %2773 = vmatprep.subr.mxu0 0.0
        %v2774 = vand.u32 %v1432, 4294901760
        %2775 = vmatpush1.msra.mxu0 %v2774
        %2776 = vmatprep.subr.mxu0 0.0
        %v2777 = vand.u32 %v1431, 4294901760
        %2778 = vmatpush1.msra.mxu0 %v2777
        %2779 = vmatprep.subr.mxu0 0.0
        %v2780 = vand.u32 %v1430, 4294901760
        %2781 = vmatpush1.msra.mxu0 %v2780
        %2782 = vmatprep.subr.mxu0 0.0
        %v2783 = vand.u32 %v1429, 4294901760
        %2784 = vmatpush1.msra.mxu0 %v2783
        %2785 = vmatprep.subr.mxu0 0.0
        %v2786 = vand.u32 %v1428, 4294901760
        %2787 = vmatpush1.msra.mxu0 %v2786
        %2788 = vmatprep.subr.mxu0 0.0
        %v2789 = vand.u32 %v1427, 4294901760
        %2790 = vmatpush1.msra.mxu0 %v2789
        %2791 = vmatprep.subr.mxu0 0.0
        %2792 = vmatpush2.msra.mxu0 0.0
        %2793 = vmatprep.subr.mxu0 0.0
        %2794 = vmatpush2.msra.mxu0 0.0
        %2795 = vmatprep.subr.mxu0 0.0
        %2796 = vmatpush2.msra.mxu0 0.0
        %2797 = vmatprep.subr.mxu0 0.0
        %2798 = vmatpush2.msra.mxu0 0.0
        %2799 = vmatprep.subr.mxu0 0.0
        %2800 = vmatpush2.msra.mxu0 0.0
        %2801 = vmatprep.subr.mxu0 0.0
        %2802 = vmatpush2.msra.mxu0 0.0
        %2803 = vmatprep.subr.mxu0 0.0
        %2804 = vmatpush2.msra.mxu0 0.0
        %2805 = vmatprep.subr.mxu0 0.0
        %2806 = vmatpush2.msra.mxu0 0.0
        %2807 = vmatprep.subr.mxu0 0.0
        %2808 = vmatpush2.msra.mxu0 0.0
        %2809 = vmatprep.subr.mxu0 0.0
        %2810 = vmatpush2.msra.mxu0 0.0
        %2811 = vmatprep.subr.mxu0 0.0
        %2812 = vmatpush2.msra.mxu0 0.0
        %2813 = vmatprep.subr.mxu0 0.0
        %2814 = vmatpush2.msra.mxu0 0.0
        %2815 = vmatprep.subr.mxu0 0.0
        %2816 = vmatpush2.msra.mxu0 0.0
        %2817 = vmatprep.subr.mxu0 0.0
        %2818 = vmatpush2.msra.mxu0 0.0
        %2819 = vmatprep.subr.mxu0 0.0
        %2820 = vmatpush2.msra.mxu0 0.0
        %2821 = vmatprep.subr.mxu0 0.0
        %2822 = vmatpush2.msra.mxu0 0.0
        %2823 = vmatprep.mubr.f32.mxu0 0.0
        %v2824 = vand.u32 %v2171, 4294901760
        %2825 = vmatmul.mubr.f32.gmra.mxu0 %v2824
        %v2826 = vpop.f32.mrf.mxu0
        %v2827 = vadd.f32 %v2730, %v2826
        %v2828 = vpop.f32.mrf.mxu0
        %2829 = vmatprep.mubr.f32.mxu0 0.0
        %v2830 = vand.u32 %v2174, 4294901760
        %2831 = vmatmul.mubr.f32.gmra.mxu0 %v2830
        %v2832 = vpop.f32.mrf.mxu0
        %v2833 = vadd.f32 %v2736, %v2832
        %v2834 = vpop.f32.mrf.mxu0
        %2835 = vmatprep.mubr.f32.mxu0 0.0
        %v2836 = vand.u32 %v2177, 4294901760
        %2837 = vmatmul.mubr.f32.gmra.mxu0 %v2836
        %v2838 = vpop.f32.mrf.mxu0
        %v2839 = vadd.f32 %v2742, %v2838
        %v2840 = vpop.f32.mrf.mxu0
        %2841 = vmatprep.mubr.f32.mxu0 0.0
        %v2842 = vand.u32 %v2180, 4294901760
        %2843 = vmatmul.mubr.f32.gmra.mxu0 %v2842
        %v2844 = vpop.f32.mrf.mxu0
        %v2845 = vadd.f32 %v2748, %v2844
        %v2846 = vpop.f32.mrf.mxu0
        %2847 = vdwg.mxu0
        %v2848 = vld [vmem:[%s325] sm:$0x1]
        %v2849 = vlaneseq
        %v2850 = vshrl.u32 %v2849, 7
        %v2851 = vadd.s32 %v2850, 8
        %v2852 = vlaneseq
        %v2853 = vshrl.u32 %v2852, 7
        %v2854 = vsub.s32 0, %v2853
        %v2855 = vrot.slane %v2848, %v2854
        %vm2856 = vcmp.eq.s32.totalorder %v2850, %v2855
        %vm2857 = vcmp.eq.s32.totalorder %v2851, %v2855
        %v2858 = vsel %vm2856, 1, 0
        %v2859 = vsel %vm2857, 1, 0
        %v2860 = vcvt.s32.f32 %v2858
        %v2861 = vcvt.s32.f32 %v2859
        %v2862 = vmul.f32 %v2827, %v2860
        %v2863 = vmul.f32 %v2833, %v2861
        %v2864 = vadd.f32 %v2862, %v2863
        %v2865 = vrot.slane %v2864, 4
        %v2866 = vadd.f32 %v2864, %v2865
        %v2867 = vrot.slane %v2866, 2
        %v2868 = vadd.f32 %v2866, %v2867
        %v2869 = vrot.slane %v2868, 1
        %v2870 = vadd.f32 %v2868, %v2869
        %v2871 = vmul.f32 %v2839, %v2860
        %v2872 = vmul.f32 %v2845, %v2861
        %v2873 = vadd.f32 %v2871, %v2872
        %v2874 = vrot.slane %v2873, 4
        %v2875 = vadd.f32 %v2873, %v2874
        %v2876 = vrot.slane %v2875, 2
        %v2877 = vadd.f32 %v2875, %v2876
        %v2878 = vrot.slane %v2877, 1
        %v2879 = vadd.f32 %v2877, %v2878
        %v2880 = vmul.f32 %v2121, %v2121
        %v2881 = vmul.f32 %v2127, %v2127
        %v2882 = vmul.f32 %v2133, %v2133
        %v2883 = vmul.f32 %v2139, %v2139
        %v2884 = vadd.f32 %v2880, %v2881
        %v2885 = vadd.f32 %v2884, %v2882
        %v2886 = vadd.f32 %v2885, %v2883
        %v2887 = vrot.slane %v2886, 4
        %v2888 = vadd.f32 %v2886, %v2887
        %v2889 = vrot.slane %v2888, 2
        %v2890 = vadd.f32 %v2888, %v2889
        %v2891 = vrot.slane %v2890, 1
        %v2892 = vadd.f32 %v2890, %v2891
        %v2893 = vmax.f32 %v2892, 1e-16
        %v2894 = vrsqrt.pop %v2893
        %v2895 = vmul.f32 %v2879, %v2894
        %2896 = vst [vmem:[%s322] sm:$0x1] %v2895
        %v2897 = vmul.f32 %v2870, %v2894
        %2898 = vst [vmem:[%s322 + $0x1] sm:$0x1] %v2897
        %s2899 = sand.u32 %s208, 1
        %s2900 = scalar_lea.sflag [#allocation3], %s2899
        %s2901 = sand.u32 %s208, 1
        %s2902 = smul.addr %s2901, 2
        %s2903 = scalar_lea.vmem [#allocation2], %s2902
        // Predicated region
        $region53: #{agree_disagree_forward.1} parent=51 // pred_check
          %p2904 = pneg %p218
        $region54: #{agree_disagree_forward.1} parent=51 // pred_check_branch
          %2906 = sbr.rel (%p2904) target = $region56
        $region55: #{agree_disagree_forward.1} parent=51 // pred_region
          %s2908 = ssub.s32 32, 32
          %2909 = vsyncadd %s2900, %s2908
          %s2910 = smul.addr %s22, 32
          %s2911 = scalar_lea.hbm %s8, %s2910
          %s2913 = sshll.u32 %s2903, 4
          %s2914 = int_to_ptr.vmem [resolvable:$true] %s2913
          %2916 = dma.vmem_to_hbm [thread:$0]  %s2914, 32, %s2911, %s2900
        $region56: #{agree_disagree_forward.1} parent=51 // pred_fallthru
          _
      $region52: #{agree_disagree_forward.1} parent=5 // pred_fallthru
        _
      %p2917 = scmp.le.s32.totalorder 2, %s17
      // Predicated region
      $region57: #{agree_disagree_forward.1} parent=5 // pred_check
        %p2918 = pneg %p2917
      $region58: #{agree_disagree_forward.1} parent=5 // pred_check_branch
        %2920 = sbr.rel (%p2918) target = $region60
      $region59: #{agree_disagree_forward.1} parent=5 // pred_region
        %s2921 = ssub.s32 %s17, 2
        // Predicated region
        $region61: #{agree_disagree_forward.1} parent=59 // pred_check
          %p2922 = pneg %p224
        $region62: #{agree_disagree_forward.1} parent=59 // pred_check_branch
          %2924 = sbr.rel (%p2922) target = $region64
        $region63: #{agree_disagree_forward.1} parent=59 // pred_region
          %s2925 = sand.u32 %s209, 1
          %s2926 = scalar_lea.sflag [#allocation3], %s2925
          %s2927 = sand.u32 %s209, 1
          %s2928 = smul.addr %s2927, 2
          %s2929 = scalar_lea.vmem [#allocation2], %s2928
          %2930 = dma.done %s2926, 32
        $region64: #{agree_disagree_forward.1} parent=59 // pred_fallthru
          _
      $region60: #{agree_disagree_forward.1} parent=5 // pred_fallthru
        _
    $region6: #{agree_disagree_forward.1} parent=1 // loop_footer
      %s21 = sadd.s32 1, %s17
    $region7: #{agree_disagree_forward.1} parent=1 // loop_footer_branch
      %16 = sbr.rel target = $region3
    $region8: #{agree_disagree_forward.1} parent=1 // loop_exit
      _
    %2931 = vsyncpa [#allocation3], 1
    %s2932 = scalar_lea.sflag [#allocation3], 1
    %2933 = vsyncpa %s2932, 1

</llo_original>
